<compile_context>
chip_gen: v6e
topology: v6e:2x2x1
jax: 0.10.0
libtpu: 0.0.40
codegen_flags: <defaults>
</compile_context>

<pallas_src>
import functools

import jax
import jax.numpy as jnp
import numpy as np
from jax import lax
from jax.experimental import pallas as pl
from jax.experimental.pallas import tpu as pltpu


def _vq_kernel(x_ref, w_ref, wt_ref, w2_ref, q_ref, idx_ref, sse_ref, cnt_ref,
               *, compute_dtype):
    k = w_ref.shape[0]

    xf = x_ref[...].astype(jnp.float32)                        # (D, tn) f32 for the SSE
    xm = x_ref[...].astype(compute_dtype)                      # MXU operand dtype
    wm = w_ref[...].astype(compute_dtype)                      # (K, D)

    # d[k, n] = |w_k|^2 - 2 * w_k . x_n  (argmin-equivalent distance), lane-dense in n.
    s = jnp.dot(wm, xm, preferred_element_type=jnp.float32)    # (K, tn)  MXU
    d = w2_ref[...] - 2.0 * s                                  # (K, tn)

    # argmin over the K sublanes with first-index tie-break (== torch.argmin).
    iota_k = lax.broadcasted_iota(jnp.int32, d.shape, 0)
    dmin = jnp.min(d, axis=0, keepdims=True)                   # (1, tn)
    idx = jnp.min(jnp.where(d == dmin, iota_k, k), axis=0, keepdims=True)
    idx = jnp.minimum(idx, k - 1)                              # NaN-row guard: stay in range
    idx_ref[...] = idx                                         # (1, tn) int32, lane-dense

    # Quantized rows: qT = w^T @ onehot.  f32 operands -> exact one-hot selection.
    onehot = (iota_k == idx).astype(jnp.float32)               # (K, tn)
    q = jnp.dot(wt_ref[...].astype(jnp.float32), onehot,
                preferred_element_type=jnp.float32)            # (D, tn)  MXU
    q_ref[...] = q.astype(q_ref.dtype)

    # Per-tile partial statistics (finished cheaply in the wrapper).
    diff = q - xf
    se_row = jnp.sum(diff * diff, axis=0, keepdims=True)                    # (1, tn)
    sse_ref[...] = jnp.sum(se_row, axis=1, keepdims=True).reshape(1, 1, 1)  # (1, 1, 1)
    cnt_ref[...] = jnp.sum(onehot, axis=1, keepdims=True).reshape(1, k, 1)  # (1, K, 1)


def _vmem_budget():
    """(physical VMEM, per-kernel vmem_limit_bytes) — per-generation, with headroom."""
    cap = 64 * 1024 * 1024                         # conservative fallback (v7x per-TC)
    try:
        info = pltpu.get_tpu_info()
        cap = int(getattr(info, "vmem_capacity_bytes", cap) or cap)
    except Exception:
        pass
    # ~42 MiB on a 64 MiB part (v7x), ~96 MiB on a 128 MiB part (v5e/v6e).
    limit = int(min(0.75 * cap, cap - 22 * 2 ** 20))
    return cap, max(limit, 16 * 2 ** 20)


def _pick_tn(n, k, d, requested, vmem_cap, vmem_limit):
    """Largest multiple-of-128 row tile that divides N, fits VMEM, and keeps >=2 steps."""
    resident = (2 * k * d + k) * 4                       # w + wT + |w|^2 (f32 upper bound)
    usable = max(vmem_limit // 2 - resident, vmem_limit // 8)
    bytes_per_col = 4 * (6 * k + 5 * max(d, 8))          # (K,tn) temps + buffered x/q tiles
    mem_cap = max(usable // bytes_per_col, 128)
    target = requested if requested is not None else (2048 if vmem_cap >= 96 * 2 ** 20 else 512)
    cap = min(int(target), int(mem_cap), n)
    if requested is None and n >= 256:
        cap = min(cap, max(n // 2, 128))                 # >=2 grid steps -> both v7x TCs busy
    cap = max((cap // 128) * 128, 128)
    t = min(cap, n)
    while t >= 128:
        if n % t == 0:
            return t
        t -= 128
    return n                                             # ragged / tiny N: one full tile


def vector_quantize(inputs, embedding_weight, commitment_cost=0.25, tn=None, mxu_dtype=None):
    """Forward pass of VectorQuantizer.  inputs: [..., D]; embedding_weight: [K, D]."""
    orig_shape = inputs.shape
    k, d = embedding_weight.shape
    flat = inputs.reshape(-1, d)                         # == torch inputs.view(-1, D)
    n = flat.shape[0]

    # Layout plumbing: lane-dense along N inside the kernel.  Native dtypes for HBM traffic.
    x_t = flat.T                                         # (D, N)
    w = embedding_weight                                 # (K, D), native dtype (no upcast)
    w_t = embedding_weight.T                             # (D, K), native dtype
    w2 = jnp.sum(embedding_weight.astype(jnp.float32) ** 2, axis=1, keepdims=True)  # (K, 1)

    if mxu_dtype is None:
        both_bf16 = (inputs.dtype == jnp.bfloat16 and embedding_weight.dtype == jnp.bfloat16)
        mxu_dtype = jnp.bfloat16 if both_bf16 else jnp.float32

    vmem_cap, vmem_limit = _vmem_budget()
    tn = _pick_tn(n, k, d, tn, vmem_cap, vmem_limit)
    n_tiles = n // tn

    kernel = functools.partial(_vq_kernel, compute_dtype=mxu_dtype)
    out_shape = (
        jax.ShapeDtypeStruct((d, n), inputs.dtype),          # quantized (transposed)
        jax.ShapeDtypeStruct((1, n), jnp.int32),             # encoding indices, lane-dense
        jax.ShapeDtypeStruct((n_tiles, 1, 1), jnp.float32),  # per-tile SSE partials
        jax.ShapeDtypeStruct((n_tiles, k, 1), jnp.float32),  # per-tile code counts
    )

    def build(use_pipeline_mode):
        def spec(shape, imap, mode):
            if use_pipeline_mode and mode is not None:
                return pl.BlockSpec(shape, imap, pipeline_mode=mode)
            return pl.BlockSpec(shape, imap)

        stream = pl.Buffered(max(1, min(3, n_tiles)))        # deeper pipelining when mem-bound
        resident = pl.Buffered(1)                            # constant index_map: no re-DMA
        grid_spec = pltpu.PrefetchScalarGridSpec(
            num_scalar_prefetch=0,
            grid=(n_tiles,),
            in_specs=[
                spec((d, tn), lambda i: (0, i), stream),     # xT tile (streaming)
                spec((k, d), lambda i: (0, 0), resident),    # codebook (resident)
                spec((d, k), lambda i: (0, 0), resident),    # codebook^T (resident)
                spec((k, 1), lambda i: (0, 0), resident),    # |w|^2 (resident)
            ],
            out_specs=[
                spec((d, tn), lambda i: (0, i), stream),     # qT tile
                spec((1, tn), lambda i: (0, i), None),       # index row
                spec((1, 1, 1), lambda i: (i, 0, 0), None),  # SSE partial
                spec((1, k, 1), lambda i: (i, 0, 0), None),  # count partial
            ],
        )
        return pl.pallas_call(
            kernel,
            out_shape=out_shape,
            grid_spec=grid_spec,
            compiler_params=pltpu.CompilerParams(
                dimension_semantics=("parallel",),           # no cross-step state
                vmem_limit_bytes=vmem_limit,
            ),
        )

    try:
        q_t, idx_row, sse_part, cnt_part = build(True)(x_t, w, w_t, w2)
    except Exception:
        # Pallas build without BlockSpec(pipeline_mode=...): use default buffering.
        q_t, idx_row, sse_part, cnt_part = build(False)(x_t, w, w_t, w2)

    quantized = q_t.T.reshape(orig_shape)                    # straight-through fwd value
    encoding_indices = idx_row.reshape(-1)

    # Finish the tiny reductions (O(n_tiles * K) work) outside the kernel.
    mse = jnp.sum(sse_part) / jnp.float32(n * d)
    vq_loss = (1.0 + commitment_cost) * mse                  # q_latent + cc * e_latent
    counts = jnp.sum(cnt_part, axis=0).reshape(-1)
    avg_probs = counts / jnp.float32(n)
    perplexity = jnp.exp(-jnp.sum(avg_probs * jnp.log(avg_probs + 1e-10)))
    return quantized, vq_loss, encoding_indices, perplexity


def _reference_np(inputs, weight, commitment_cost=0.25):
    """Float64 NumPy reference mirroring the PyTorch forward pass."""
    x = np.asarray(inputs, dtype=np.float64)
    w = np.asarray(weight, dtype=np.float64)
    k, d = w.shape
    flat = x.reshape(-1, d)
    dist = (np.sum(flat ** 2, axis=1, keepdims=True) + np.sum(w ** 2, axis=1)
            - 2.0 * flat @ w.T)
    idx = np.argmin(dist, axis=1)
    q = w[idx].reshape(x.shape)
    mse = np.mean((q - x) ** 2)
    loss = (1.0 + commitment_cost) * mse
    onehot = np.eye(k)[idx]
    avg = onehot.mean(axis=0)
    perp = np.exp(-np.sum(avg * np.log(avg + 1e-10)))
    return q, loss, idx, perp


if __name__ == "__main__":
    num_embeddings = 8
    embedding_dim = 4
    commitment_cost = 0.25

    key = jax.random.PRNGKey(0)
    k_w, k_x, k_idx, k_noise = jax.random.split(key, 4)

    # nn.Embedding(K, D) with uniform_(-1/K, 1/K) init, deterministic.
    embedding_weight = jax.random.uniform(
        k_w, (num_embeddings, embedding_dim),
        minval=-1.0 / num_embeddings, maxval=1.0 / num_embeddings, dtype=jnp.float32)

    # Channels-last inputs [B, H, W, D] with D == embedding_dim -> N = 512 rows.
    x = jax.random.normal(k_x, (2, 16, 16, embedding_dim), dtype=jnp.float32)

    q_r, loss_r, idx_r, perp_r = _reference_np(x, embedding_weight, commitment_cost)

    # 1) Auto-picked tile: 2 grid steps on this shape (parallel axis, megacore-friendly).
    q, vq_loss, idx, perp = vector_quantize(x, embedding_weight, commitment_cost)
    jax.block_until_ready((q, vq_loss, idx, perp))
    np.testing.assert_allclose(np.asarray(q, dtype=np.float64), q_r, rtol=1e-6, atol=1e-6)
    np.testing.assert_array_equal(np.asarray(idx), idx_r)
    np.testing.assert_allclose(float(vq_loss), loss_r, rtol=1e-5, atol=1e-6)
    np.testing.assert_allclose(float(perp), perp_r, rtol=1e-5, atol=1e-5)

    # 2) Explicit small tile: 4 grid steps, exercises the partial-reduction path.
    q2, loss2, idx2, perp2 = vector_quantize(x, embedding_weight, commitment_cost, tn=128)
    jax.block_until_ready((q2, loss2, idx2, perp2))
    np.testing.assert_allclose(np.asarray(q2, dtype=np.float64), q_r, rtol=1e-6, atol=1e-6)
    np.testing.assert_array_equal(np.asarray(idx2), idx_r)
    np.testing.assert_allclose(float(loss2), loss_r, rtol=1e-5, atol=1e-6)
    np.testing.assert_allclose(float(perp2), perp_r, rtol=1e-5, atol=1e-5)

    # 3) bf16 path: native bf16 codebook DMA + bf16 MXU operands.  Inputs are planted next
    #    to well-separated codewords so the argmin is margin-robust to bf16 rounding.
    n_rows = 2 * 16 * 16
    w_sep = 0.2 * jnp.concatenate([jnp.eye(embedding_dim), -jnp.eye(embedding_dim)],
                                  axis=0).astype(jnp.float32)            # (8, 4)
    idx_true = jax.random.randint(k_idx, (n_rows,), 0, num_embeddings)
    noise = 0.01 * jax.random.normal(k_noise, (n_rows, embedding_dim), dtype=jnp.float32)
    x_b = (w_sep[idx_true] + noise).astype(jnp.bfloat16).reshape(2, 16, 16, embedding_dim)
    w_b = w_sep.astype(jnp.bfloat16)

    q_b, loss_b, idx_b, perp_b = vector_quantize(x_b, w_b, commitment_cost)
    jax.block_until_ready((q_b, loss_b, idx_b, perp_b))
    np.testing.assert_array_equal(np.asarray(idx_b), np.asarray(idx_true))
    np.testing.assert_allclose(
        np.asarray(q_b.astype(jnp.float32)).reshape(-1, embedding_dim),
        np.asarray(w_b.astype(jnp.float32))[np.asarray(idx_true)], rtol=0, atol=1e-6)
    xf = np.asarray(x_b.astype(jnp.float32), dtype=np.float64).reshape(-1, embedding_dim)
    qf = np.asarray(w_b.astype(jnp.float32), dtype=np.float64)[np.asarray(idx_true)]
    mse_b = np.mean((qf - xf) ** 2)
    np.testing.assert_allclose(float(loss_b), (1.0 + commitment_cost) * mse_b, rtol=1e-4)
    cnts = np.bincount(np.asarray(idx_true), minlength=num_embeddings).astype(np.float64)
    p_b = cnts / cnts.sum()
    perp_ref_b = np.exp(-np.sum(p_b * np.log(p_b + 1e-10)))
    np.testing.assert_allclose(float(perp_b), perp_ref_b, rtol=1e-5)

    print("KERNEL_OK")
</pallas_src>

<mosaic_0001>
module attributes {stable_mosaic.version = 11 : i64} {
  func.func @_vq_kernel(%arg0: i32, %arg1: memref<4x256xf32, #tpu.memory_space<vmem>>, %arg2: memref<8x4xf32, #tpu.memory_space<vmem>>, %arg3: memref<4x8xf32, #tpu.memory_space<vmem>>, %arg4: memref<8x1xf32, #tpu.memory_space<vmem>>, %arg5: memref<4x256xf32, #tpu.memory_space<vmem>>, %arg6: memref<1x256xi32, #tpu.memory_space<vmem>>, %arg7: memref<1x1x1xf32, #tpu.memory_space<vmem>>, %arg8: memref<1x8x1xf32, #tpu.memory_space<vmem>>) attributes {dimension_semantics = [#tpu.dimension_semantics<parallel>], iteration_bounds = array<i64: 2>, scalar_prefetch = 0 : i64, scratch_operands = 0 : i64, tpu.core_type = #tpu.core_type<tc>, window_params = [{pipeline_mode = #tpu.pipeline_mode<double_buffered>, transform_indices = @transform_0, window_bounds = array<i64: 4, 256>}, {pipeline_mode = #tpu.pipeline_mode<synchronous>, transform_indices = @transform_1, window_bounds = array<i64: 8, 4>}, {pipeline_mode = #tpu.pipeline_mode<synchronous>, transform_indices = @transform_2, window_bounds = array<i64: 4, 8>}, {pipeline_mode = #tpu.pipeline_mode<synchronous>, transform_indices = @transform_3, window_bounds = array<i64: 8, 1>}, {pipeline_mode = #tpu.pipeline_mode<double_buffered>, transform_indices = @transform_4, window_bounds = array<i64: 4, 256>}, {transform_indices = @transform_5, window_bounds = array<i64: 1, 256>}, {transform_indices = @transform_6, window_bounds = array<i64: 1, 1, 1>}, {transform_indices = @transform_7, window_bounds = array<i64: 1, 8, 1>}]} {
    %c0 = arith.constant 0 : index
    %c0_0 = arith.constant 0 : index
    %0 = vector.load %arg1[%c0, %c0_0] : memref<4x256xf32, #tpu.memory_space<vmem>>, vector<4x256xf32>
    %c0_1 = arith.constant 0 : index
    %c0_2 = arith.constant 0 : index
    %1 = vector.load %arg1[%c0_1, %c0_2] : memref<4x256xf32, #tpu.memory_space<vmem>>, vector<4x256xf32>
    %c0_3 = arith.constant 0 : index
    %c0_4 = arith.constant 0 : index
    %2 = vector.load %arg2[%c0_3, %c0_4] : memref<8x4xf32, #tpu.memory_space<vmem>>, vector<8x4xf32>
    %cst = arith.constant dense<0.000000e+00> : vector<8x256xf32>
    %3 = tpu.matmul %2, %1, %cst {dimension_numbers = #tpu.dot_dimension_numbers<[1], [0], [0], [1], [0, 0, 1, 1], [], []>} : vector<8x4xf32>, vector<4x256xf32>, vector<8x256xf32> -> vector<8x256xf32>
    %c0_5 = arith.constant 0 : index
    %c0_6 = arith.constant 0 : index
    %4 = vector.load %arg4[%c0_5, %c0_6] : memref<8x1xf32, #tpu.memory_space<vmem>>, vector<8x1xf32>
    %cst_7 = arith.constant 2.000000e+00 : f32
    %5 = vector.broadcast %cst_7 : f32 to vector<8x256xf32>
    %6 = arith.mulf %5, %3 : vector<8x256xf32>
    %7 = vector.broadcast %4 : vector<8x1xf32> to vector<8x256xf32>
    %8 = arith.subf %7, %6 : vector<8x256xf32>
    %9 = tpu.iota {dimensions = array<i32: 0>} : vector<8x256xi32>
    %cst_8 = arith.constant dense<0x7F800000> : vector<256xf32>
    %10 = vector.multi_reduction <minimumf>, %8, %cst_8 [0] : vector<8x256xf32> to vector<256xf32>
    %11 = vector.shape_cast %10 : vector<256xf32> to vector<1x256xf32>
    %12 = vector.broadcast %11 : vector<1x256xf32> to vector<8x256xf32>
    %13 = arith.cmpf oeq, %8, %12 : vector<8x256xf32>
    %c8_i32 = arith.constant 8 : i32
    %14 = vector.broadcast %c8_i32 : i32 to vector<8x256xi32>
    %15 = arith.select %13, %9, %14 : vector<8x256xi1>, vector<8x256xi32>
    %cst_9 = arith.constant dense<2147483647> : vector<256xi32>
    %16 = vector.multi_reduction <minsi>, %15, %cst_9 [0] : vector<8x256xi32> to vector<256xi32>
    %17 = vector.shape_cast %16 : vector<256xi32> to vector<1x256xi32>
    %c7_i32 = arith.constant 7 : i32
    %18 = vector.broadcast %c7_i32 : i32 to vector<1x256xi32>
    %19 = arith.minsi %17, %18 : vector<1x256xi32>
    %c0_10 = arith.constant 0 : index
    %c0_11 = arith.constant 0 : index
    %20 = vector.load %arg6[%c0_10, %c0_11] : memref<1x256xi32, #tpu.memory_space<vmem>>, vector<1x256xi32>
    tpu.vector_store %arg6[%c0_10, %c0_11], %19 {strides = array<i32>} : memref<1x256xi32, #tpu.memory_space<vmem>>, vector<1x256xi32>,
    %21 = vector.broadcast %19 : vector<1x256xi32> to vector<8x256xi32>
    %22 = arith.cmpi eq, %9, %21 : vector<8x256xi32>
    %23 = arith.extui %22 : vector<8x256xi1> to vector<8x256xi32>
    %24 = arith.sitofp %23 : vector<8x256xi32> to vector<8x256xf32>
    %c0_12 = arith.constant 0 : index
    %c0_13 = arith.constant 0 : index
    %25 = vector.load %arg3[%c0_12, %c0_13] : memref<4x8xf32, #tpu.memory_space<vmem>>, vector<4x8xf32>
    %cst_14 = arith.constant dense<0.000000e+00> : vector<4x256xf32>
    %26 = tpu.matmul %25, %24, %cst_14 {dimension_numbers = #tpu.dot_dimension_numbers<[1], [0], [0], [1], [0, 0, 1, 1], [], []>} : vector<4x8xf32>, vector<8x256xf32>, vector<4x256xf32> -> vector<4x256xf32>
    %c0_15 = arith.constant 0 : index
    %c0_16 = arith.constant 0 : index
    %27 = vector.load %arg5[%c0_15, %c0_16] : memref<4x256xf32, #tpu.memory_space<vmem>>, vector<4x256xf32>
    tpu.vector_store %arg5[%c0_15, %c0_16], %26 {strides = array<i32>} : memref<4x256xf32, #tpu.memory_space<vmem>>, vector<4x256xf32>,
    %28 = arith.subf %26, %0 : vector<4x256xf32>
    %29 = arith.mulf %28, %28 : vector<4x256xf32>
    %cst_17 = arith.constant dense<0.000000e+00> : vector<256xf32>
    %30 = vector.multi_reduction <add>, %29, %cst_17 [0] : vector<4x256xf32> to vector<256xf32>
    %31 = vector.shape_cast %30 : vector<256xf32> to vector<1x256xf32>
    %cst_18 = arith.constant dense<0.000000e+00> : vector<1xf32>
    %32 = vector.multi_reduction <add>, %31, %cst_18 [1] : vector<1x256xf32> to vector<1xf32>
    %33 = vector.shape_cast %32 : vector<1xf32> to vector<1x1xf32>
    %34 = vector.shape_cast %33 : vector<1x1xf32> to vector<1x1x1xf32>
    %c0_19 = arith.constant 0 : index
    %c0_20 = arith.constant 0 : index
    %c0_21 = arith.constant 0 : index
    %35 = vector.load %arg7[%c0_19, %c0_20, %c0_21] : memref<1x1x1xf32, #tpu.memory_space<vmem>>, vector<1x1x1xf32>
    tpu.vector_store %arg7[%c0_19, %c0_20, %c0_21], %34 {strides = array<i32>} : memref<1x1x1xf32, #tpu.memory_space<vmem>>, vector<1x1x1xf32>,
    %cst_22 = arith.constant dense<0.000000e+00> : vector<8xf32>
    %36 = vector.multi_reduction <add>, %24, %cst_22 [1] : vector<8x256xf32> to vector<8xf32>
    %37 = vector.shape_cast %36 : vector<8xf32> to vector<8x1xf32>
    %38 = vector.shape_cast %37 : vector<8x1xf32> to vector<1x8x1xf32>
    %c0_23 = arith.constant 0 : index
    %c0_24 = arith.constant 0 : index
    %c0_25 = arith.constant 0 : index
    %39 = vector.load %arg8[%c0_23, %c0_24, %c0_25] : memref<1x8x1xf32, #tpu.memory_space<vmem>>, vector<1x8x1xf32>
    tpu.vector_store %arg8[%c0_23, %c0_24, %c0_25], %38 {strides = array<i32>} : memref<1x8x1xf32, #tpu.memory_space<vmem>>, vector<1x8x1xf32>,
    return
  }
  func.func @transform_0(%arg0: i32) -> (i32, i32) {
    %c0_i32 = arith.constant 0 : i32
    %c0_i32_0 = arith.constant 0 : i32
    return %c0_i32, %arg0 : i32, i32
  }
  func.func @transform_1(%arg0: i32) -> (i32, i32) {
    %c0_i32 = arith.constant 0 : i32
    %c0_i32_0 = arith.constant 0 : i32
    %c0_i32_1 = arith.constant 0 : i32
    return %c0_i32, %c0_i32_0 : i32, i32
  }
  func.func @transform_2(%arg0: i32) -> (i32, i32) {
    %c0_i32 = arith.constant 0 : i32
    %c0_i32_0 = arith.constant 0 : i32
    %c0_i32_1 = arith.constant 0 : i32
    return %c0_i32, %c0_i32_0 : i32, i32
  }
  func.func @transform_3(%arg0: i32) -> (i32, i32) {
    %c0_i32 = arith.constant 0 : i32
    %c0_i32_0 = arith.constant 0 : i32
    %c0_i32_1 = arith.constant 0 : i32
    return %c0_i32, %c0_i32_0 : i32, i32
  }
  func.func @transform_4(%arg0: i32) -> (i32, i32) {
    %c0_i32 = arith.constant 0 : i32
    %c0_i32_0 = arith.constant 0 : i32
    return %c0_i32, %arg0 : i32, i32
  }
  func.func @transform_5(%arg0: i32) -> (i32, i32) {
    %c0_i32 = arith.constant 0 : i32
    %c0_i32_0 = arith.constant 0 : i32
    return %c0_i32, %arg0 : i32, i32
  }
  func.func @transform_6(%arg0: i32) -> (i32, i32, i32) {
    %c0_i32 = arith.constant 0 : i32
    %c0_i32_0 = arith.constant 0 : i32
    %c0_i32_1 = arith.constant 0 : i32
    return %arg0, %c0_i32, %c0_i32_0 : i32, i32, i32
  }
  func.func @transform_7(%arg0: i32) -> (i32, i32, i32) {
    %c0_i32 = arith.constant 0 : i32
    %c0_i32_0 = arith.constant 0 : i32
    %c0_i32_1 = arith.constant 0 : i32
    return %arg0, %c0_i32, %c0_i32_0 : i32, i32, i32
  }
}

module attributes {stable_mosaic.version = 11 : i64} {
  func.func @_vq_kernel(%arg0: i32, %arg1: memref<4x256xf32, #tpu.memory_space<vmem>>, %arg2: memref<8x4xf32, #tpu.memory_space<vmem>>, %arg3: memref<4x8xf32, #tpu.memory_space<vmem>>, %arg4: memref<8x1xf32, #tpu.memory_space<vmem>>, %arg5: memref<4x256xf32, #tpu.memory_space<vmem>>, %arg6: memref<1x256xi32, #tpu.memory_space<vmem>>, %arg7: memref<1x1x1xf32, #tpu.memory_space<vmem>>, %arg8: memref<1x8x1xf32, #tpu.memory_space<vmem>>) attributes {dimension_semantics = [#tpu.dimension_semantics<parallel>], iteration_bounds = array<i64: 2>, scalar_prefetch = 0 : i64, scratch_operands = 0 : i64, tpu.core_type = #tpu.core_type<tc>, window_params = [{transform_indices = @transform_0, window_bounds = array<i64: 4, 256>}, {pipeline_mode = #tpu.pipeline_mode<synchronous>, transform_indices = @transform_1, window_bounds = array<i64: 8, 4>}, {pipeline_mode = #tpu.pipeline_mode<synchronous>, transform_indices = @transform_2, window_bounds = array<i64: 4, 8>}, {pipeline_mode = #tpu.pipeline_mode<synchronous>, transform_indices = @transform_3, window_bounds = array<i64: 8, 1>}, {transform_indices = @transform_4, window_bounds = array<i64: 4, 256>}, {transform_indices = @transform_5, window_bounds = array<i64: 1, 256>}, {transform_indices = @transform_6, window_bounds = array<i64: 1, 1, 1>}, {transform_indices = @transform_7, window_bounds = array<i64: 1, 8, 1>}]} {
    %c0 = arith.constant 0 : index
    %c0_0 = arith.constant 0 : index
    %0 = vector.load %arg1[%c0, %c0_0] : memref<4x256xf32, #tpu.memory_space<vmem>>, vector<4x256xf32>
    %c0_1 = arith.constant 0 : index
    %c0_2 = arith.constant 0 : index
    %1 = vector.load %arg1[%c0_1, %c0_2] : memref<4x256xf32, #tpu.memory_space<vmem>>, vector<4x256xf32>
    %c0_3 = arith.constant 0 : index
    %c0_4 = arith.constant 0 : index
    %2 = vector.load %arg2[%c0_3, %c0_4] : memref<8x4xf32, #tpu.memory_space<vmem>>, vector<8x4xf32>
    %cst = arith.constant dense<0.000000e+00> : vector<8x256xf32>
    %3 = tpu.matmul %2, %1, %cst {dimension_numbers = #tpu.dot_dimension_numbers<[1], [0], [0], [1], [0, 0, 1, 1], [], []>} : vector<8x4xf32>, vector<4x256xf32>, vector<8x256xf32> -> vector<8x256xf32>
    %c0_5 = arith.constant 0 : index
    %c0_6 = arith.constant 0 : index
    %4 = vector.load %arg4[%c0_5, %c0_6] : memref<8x1xf32, #tpu.memory_space<vmem>>, vector<8x1xf32>
    %cst_7 = arith.constant 2.000000e+00 : f32
    %5 = vector.broadcast %cst_7 : f32 to vector<8x256xf32>
    %6 = arith.mulf %5, %3 : vector<8x256xf32>
    %7 = vector.broadcast %4 : vector<8x1xf32> to vector<8x256xf32>
    %8 = arith.subf %7, %6 : vector<8x256xf32>
    %9 = tpu.iota {dimensions = array<i32: 0>} : vector<8x256xi32>
    %cst_8 = arith.constant dense<0x7F800000> : vector<256xf32>
    %10 = vector.multi_reduction <minimumf>, %8, %cst_8 [0] : vector<8x256xf32> to vector<256xf32>
    %11 = vector.shape_cast %10 : vector<256xf32> to vector<1x256xf32>
    %12 = vector.broadcast %11 : vector<1x256xf32> to vector<8x256xf32>
    %13 = arith.cmpf oeq, %8, %12 : vector<8x256xf32>
    %c8_i32 = arith.constant 8 : i32
    %14 = vector.broadcast %c8_i32 : i32 to vector<8x256xi32>
    %15 = arith.select %13, %9, %14 : vector<8x256xi1>, vector<8x256xi32>
    %cst_9 = arith.constant dense<2147483647> : vector<256xi32>
    %16 = vector.multi_reduction <minsi>, %15, %cst_9 [0] : vector<8x256xi32> to vector<256xi32>
    %17 = vector.shape_cast %16 : vector<256xi32> to vector<1x256xi32>
    %c7_i32 = arith.constant 7 : i32
    %18 = vector.broadcast %c7_i32 : i32 to vector<1x256xi32>
    %19 = arith.minsi %17, %18 : vector<1x256xi32>
    %c0_10 = arith.constant 0 : index
    %c0_11 = arith.constant 0 : index
    %20 = vector.load %arg6[%c0_10, %c0_11] : memref<1x256xi32, #tpu.memory_space<vmem>>, vector<1x256xi32>
    tpu.vector_store %arg6[%c0_10, %c0_11], %19 {strides = array<i32>} : memref<1x256xi32, #tpu.memory_space<vmem>>, vector<1x256xi32>,
    %21 = vector.broadcast %19 : vector<1x256xi32> to vector<8x256xi32>
    %22 = arith.cmpi eq, %9, %21 : vector<8x256xi32>
    %23 = arith.extui %22 : vector<8x256xi1> to vector<8x256xi32>
    %24 = arith.sitofp %23 : vector<8x256xi32> to vector<8x256xf32>
    %c0_12 = arith.constant 0 : index
    %c0_13 = arith.constant 0 : index
    %25 = vector.load %arg3[%c0_12, %c0_13] : memref<4x8xf32, #tpu.memory_space<vmem>>, vector<4x8xf32>
    %cst_14 = arith.constant dense<0.000000e+00> : vector<4x256xf32>
    %26 = tpu.matmul %25, %24, %cst_14 {dimension_numbers = #tpu.dot_dimension_numbers<[1], [0], [0], [1], [0, 0, 1, 1], [], []>} : vector<4x8xf32>, vector<8x256xf32>, vector<4x256xf32> -> vector<4x256xf32>
    %c0_15 = arith.constant 0 : index
    %c0_16 = arith.constant 0 : index
    %27 = vector.load %arg5[%c0_15, %c0_16] : memref<4x256xf32, #tpu.memory_space<vmem>>, vector<4x256xf32>
    tpu.vector_store %arg5[%c0_15, %c0_16], %26 {strides = array<i32>} : memref<4x256xf32, #tpu.memory_space<vmem>>, vector<4x256xf32>,
    %28 = arith.subf %26, %0 : vector<4x256xf32>
    %29 = arith.mulf %28, %28 : vector<4x256xf32>
    %cst_17 = arith.constant dense<0.000000e+00> : vector<256xf32>
    %30 = vector.multi_reduction <add>, %29, %cst_17 [0] : vector<4x256xf32> to vector<256xf32>
    %31 = vector.shape_cast %30 : vector<256xf32> to vector<1x256xf32>
    %cst_18 = arith.constant dense<0.000000e+00> : vector<1xf32>
    %32 = vector.multi_reduction <add>, %31, %cst_18 [1] : vector<1x256xf32> to vector<1xf32>
    %33 = vector.shape_cast %32 : vector<1xf32> to vector<1x1xf32>
    %34 = vector.shape_cast %33 : vector<1x1xf32> to vector<1x1x1xf32>
    %c0_19 = arith.constant 0 : index
    %c0_20 = arith.constant 0 : index
    %c0_21 = arith.constant 0 : index
    %35 = vector.load %arg7[%c0_19, %c0_20, %c0_21] : memref<1x1x1xf32, #tpu.memory_space<vmem>>, vector<1x1x1xf32>
    tpu.vector_store %arg7[%c0_19, %c0_20, %c0_21], %34 {strides = array<i32>} : memref<1x1x1xf32, #tpu.memory_space<vmem>>, vector<1x1x1xf32>,
    %cst_22 = arith.constant dense<0.000000e+00> : vector<8xf32>
    %36 = vector.multi_reduction <add>, %24, %cst_22 [1] : vector<8x256xf32> to vector<8xf32>
    %37 = vector.shape_cast %36 : vector<8xf32> to vector<8x1xf32>
    %38 = vector.shape_cast %37 : vector<8x1xf32> to vector<1x8x1xf32>
    %c0_23 = arith.constant 0 : index
    %c0_24 = arith.constant 0 : index
    %c0_25 = arith.constant 0 : index
    %39 = vector.load %arg8[%c0_23, %c0_24, %c0_25] : memref<1x8x1xf32, #tpu.memory_space<vmem>>, vector<1x8x1xf32>
    tpu.vector_store %arg8[%c0_23, %c0_24, %c0_25], %38 {strides = array<i32>} : memref<1x8x1xf32, #tpu.memory_space<vmem>>, vector<1x8x1xf32>,
    return
  }
  func.func @transform_0(%arg0: i32) -> (i32, i32) {
    %c0_i32 = arith.constant 0 : i32
    %c0_i32_0 = arith.constant 0 : i32
    return %c0_i32, %arg0 : i32, i32
  }
  func.func @transform_1(%arg0: i32) -> (i32, i32) {
    %c0_i32 = arith.constant 0 : i32
    %c0_i32_0 = arith.constant 0 : i32
    %c0_i32_1 = arith.constant 0 : i32
    return %c0_i32, %c0_i32_0 : i32, i32
  }
  func.func @transform_2(%arg0: i32) -> (i32, i32) {
    %c0_i32 = arith.constant 0 : i32
    %c0_i32_0 = arith.constant 0 : i32
    %c0_i32_1 = arith.constant 0 : i32
    return %c0_i32, %c0_i32_0 : i32, i32
  }
  func.func @transform_3(%arg0: i32) -> (i32, i32) {
    %c0_i32 = arith.constant 0 : i32
    %c0_i32_0 = arith.constant 0 : i32
    %c0_i32_1 = arith.constant 0 : i32
    return %c0_i32, %c0_i32_0 : i32, i32
  }
  func.func @transform_4(%arg0: i32) -> (i32, i32) {
    %c0_i32 = arith.constant 0 : i32
    %c0_i32_0 = arith.constant 0 : i32
    return %c0_i32, %arg0 : i32, i32
  }
  func.func @transform_5(%arg0: i32) -> (i32, i32) {
    %c0_i32 = arith.constant 0 : i32
    %c0_i32_0 = arith.constant 0 : i32
    return %c0_i32, %arg0 : i32, i32
  }
  func.func @transform_6(%arg0: i32) -> (i32, i32, i32) {
    %c0_i32 = arith.constant 0 : i32
    %c0_i32_0 = arith.constant 0 : i32
    %c0_i32_1 = arith.constant 0 : i32
    return %arg0, %c0_i32, %c0_i32_0 : i32, i32, i32
  }
  func.func @transform_7(%arg0: i32) -> (i32, i32, i32) {
    %c0_i32 = arith.constant 0 : i32
    %c0_i32_0 = arith.constant 0 : i32
    %c0_i32_1 = arith.constant 0 : i32
    return %arg0, %c0_i32, %c0_i32_0 : i32, i32, i32
  }
}

</mosaic_0001>

<llo_original>
// kernel: tpu_custom_call.1
$region0: #{tpu_custom_call.1}
  #allocation0 [shape = 'u32[]', space=smem, size = 0x4, offset = 0x4, fixed_abs, tag = 'smem constant byte address 0x4 - core index']
  #allocation1 [shape = 'u32[144,128]{1,0:T(1,128)}', space=vmem, size = 0x12000, scoped, tag = 'internal scratch']
  %s0 = inlined_call_operand.vmem [shape: f32[4,512], index: 0, kind: input, shape index: {}]
  %s1 = inlined_call_operand.vmem [shape: f32[8,4], index: 1, kind: input, shape index: {}]
  %s2 = inlined_call_operand.vmem [shape: f32[4,8], index: 2, kind: input, shape index: {}]
  %s3 = inlined_call_operand.vmem [shape: f32[8,1], index: 3, kind: input, shape index: {}]
  %s4 = inlined_call_operand.hbm [shape: f32[4,512], index: 4, kind: output, shape index: {0}]
  %s5 = inlined_call_operand.hbm [shape: s32[1,512], index: 5, kind: output, shape index: {1}]
  %s6 = inlined_call_operand.vmem [shape: f32[2,1,1], index: 6, kind: output, shape index: {2}]
  %s7 = inlined_call_operand.vmem [shape: f32[2,8,1], index: 7, kind: output, shape index: {3}]
  %8 = xla_tuple %s4, %s5, %s6, %s7
  %s9 = sld [smem:[#allocation0]]
  $region73: #{tpu_custom_call.1} parent=0
    _
  %s11 = ssub.s32 1, %s9
  %s12 = scalar_select 0, %s11, %s9
  $region1: #{tpu_custom_call.1} parent=0
    #allocation2 [shape = 'u8[8192]{0}', space=vmem, size = 0x2000, scoped, tag = 'output window, operand 0']
    #allocation3 [shape = 's32[2]{0}', space=sflag, size = 0x8, scoped, tag = 'scoped memory for tpu_custom_call.1']
    #allocation4 [shape = 'u8[2048]{0}', space=vmem, size = 0x800, scoped, tag = 'output window, operand 1']
    #allocation5 [shape = 's32[2]{0}', space=sflag, size = 0x8, scoped, tag = 'scoped memory for tpu_custom_call.1']
    %13 = vsyncpa [#allocation3], 0
    %s14 = scalar_lea.sflag [#allocation3], 1
    %15 = vsyncpa %s14, 0
    %16 = vsyncpa [#allocation5], 0
    %s17 = scalar_lea.sflag [#allocation5], 1
    %18 = vsyncpa %s17, 0
    loop: start=0, step=1, limit=4
    $region2: #{tpu_custom_call.1} parent=1 // loop_pre_header
      _
    $region3: #{tpu_custom_call.1} parent=1 // loop_header
      %s20 = sphi 0, %s24
      %p21 = scmp.ge.s32.totalorder %s20, 4
      %s30 = sphi 0, %s32
      %s33 = sphi 0, %s30
      %s34 = sphi 0, %s33
      %s50 = sphi 0, %s34
      %s54 = sphi 0, %s54
      %s56 = sphi 0, %s54
      %s57 = sphi 0, %s56
      %s71 = sphi 0, %s57
      %s75 = sphi 0, %s75
      %s77 = sphi 0, %s75
      %s78 = sphi 0, %s77
      %s92 = sphi 0, %s78
      %s96 = sphi 0, %s96
      %s98 = sphi 0, %s96
      %s99 = sphi 0, %s98
      %s113 = sphi 0, %s99
      %s119 = sphi 0, %s121
      %s122 = sphi 0, %s119
      %s123 = sphi 0, %s122
      %s139 = sphi 0, %s123
      %s145 = sphi 0, %s147
      %s148 = sphi 0, %s145
      %s149 = sphi 0, %s148
      %s165 = sphi 0, %s149
      %s171 = sphi 0, %s173
      %s174 = sphi 0, %s171
      %s175 = sphi 0, %s174
      %s191 = sphi 0, %s175
      %s197 = sphi 0, %s199
      %s200 = sphi 0, %s197
      %s201 = sphi 0, %s200
      %s217 = sphi 0, %s201
    $region4: #{tpu_custom_call.1} parent=1 // loop_header_branch
      %23 = sbr.rel (%p21) target = $region8
    $region5: #{tpu_custom_call.1} parent=1 // loop_body
      %s25 = ssub.s32 %s20, 1
      %s26 = ssub.s32 %s20, 2
      %s27 = sadd.s32 %s20, 1
      %s28 = ssub.s32 %s20, %s27
      %p29 = scmp.eq.s32.totalorder %s28, 0
      %s31 = sadd.s32 %s30, 1
      %s32 = scalar_select %p29, %s30, %s31
      %p35 = pneg %p29
      %p36 = scmp.eq.s32.totalorder %s20, 1
      %p37 = por %p35, %p36
      %p38 = scmp.ne.s32.totalorder %s30, %s33
      %p39 = scmp.eq.s32.totalorder %s20, 0
      %p40 = por %p38, %p39
      %p41 = scmp.ne.s32.totalorder %s30, %s33
      %p42 = scmp.eq.s32.totalorder %s25, 1
      %p43 = por %p41, %p42
      %p44 = scmp.ne.s32.totalorder %s33, %s34
      %p45 = scmp.eq.s32.totalorder %s25, 0
      %p46 = por %p44, %p45
      %p47 = scmp.ne.s32.totalorder %s33, %s34
      %p48 = scmp.eq.s32.totalorder %s26, 1
      %p49 = por %p47, %p48
      %p51 = scmp.ne.s32.totalorder %s34, %s50
      %p52 = scmp.eq.s32.totalorder %s26, 0
      %p53 = por %p51, %p52
      %s55 = sadd.s32 %s54, 1
      %p58 = scmp.eq.s32.totalorder %s20, 1
      %p59 = scmp.ne.s32.totalorder %s54, %s56
      %p60 = scmp.eq.s32.totalorder %s20, 0
      %p61 = por %p59, %p60
      %p62 = scmp.ne.s32.totalorder %s54, %s56
      %p63 = scmp.eq.s32.totalorder %s25, 1
      %p64 = por %p62, %p63
      %p65 = scmp.ne.s32.totalorder %s56, %s57
      %p66 = scmp.eq.s32.totalorder %s25, 0
      %p67 = por %p65, %p66
      %p68 = scmp.ne.s32.totalorder %s56, %s57
      %p69 = scmp.eq.s32.totalorder %s26, 1
      %p70 = por %p68, %p69
      %p72 = scmp.ne.s32.totalorder %s57, %s71
      %p73 = scmp.eq.s32.totalorder %s26, 0
      %p74 = por %p72, %p73
      %s76 = sadd.s32 %s75, 1
      %p79 = scmp.eq.s32.totalorder %s20, 1
      %p80 = scmp.ne.s32.totalorder %s75, %s77
      %p81 = scmp.eq.s32.totalorder %s20, 0
      %p82 = por %p80, %p81
      %p83 = scmp.ne.s32.totalorder %s75, %s77
      %p84 = scmp.eq.s32.totalorder %s25, 1
      %p85 = por %p83, %p84
      %p86 = scmp.ne.s32.totalorder %s77, %s78
      %p87 = scmp.eq.s32.totalorder %s25, 0
      %p88 = por %p86, %p87
      %p89 = scmp.ne.s32.totalorder %s77, %s78
      %p90 = scmp.eq.s32.totalorder %s26, 1
      %p91 = por %p89, %p90
      %p93 = scmp.ne.s32.totalorder %s78, %s92
      %p94 = scmp.eq.s32.totalorder %s26, 0
      %p95 = por %p93, %p94
      %s97 = sadd.s32 %s96, 1
      %p100 = scmp.eq.s32.totalorder %s20, 1
      %p101 = scmp.ne.s32.totalorder %s96, %s98
      %p102 = scmp.eq.s32.totalorder %s20, 0
      %p103 = por %p101, %p102
      %p104 = scmp.ne.s32.totalorder %s96, %s98
      %p105 = scmp.eq.s32.totalorder %s25, 1
      %p106 = por %p104, %p105
      %p107 = scmp.ne.s32.totalorder %s98, %s99
      %p108 = scmp.eq.s32.totalorder %s25, 0
      %p109 = por %p107, %p108
      %p110 = scmp.ne.s32.totalorder %s98, %s99
      %p111 = scmp.eq.s32.totalorder %s26, 1
      %p112 = por %p110, %p111
      %p114 = scmp.ne.s32.totalorder %s99, %s113
      %p115 = scmp.eq.s32.totalorder %s26, 0
      %p116 = por %p114, %p115
      %s117 = ssub.s32 %s20, %s27
      %p118 = scmp.eq.s32.totalorder %s117, 0
      %s120 = sadd.s32 %s119, 1
      %s121 = scalar_select %p118, %s119, %s120
      %p124 = pneg %p118
      %p125 = scmp.eq.s32.totalorder %s20, 1
      %p126 = por %p124, %p125
      %p127 = scmp.ne.s32.totalorder %s119, %s122
      %p128 = scmp.eq.s32.totalorder %s20, 0
      %p129 = por %p127, %p128
      %p130 = scmp.ne.s32.totalorder %s119, %s122
      %p131 = scmp.eq.s32.totalorder %s25, 1
      %p132 = por %p130, %p131
      %p133 = scmp.ne.s32.totalorder %s122, %s123
      %p134 = scmp.eq.s32.totalorder %s25, 0
      %p135 = por %p133, %p134
      %p136 = scmp.ne.s32.totalorder %s122, %s123
      %p137 = scmp.eq.s32.totalorder %s26, 1
      %p138 = por %p136, %p137
      %p140 = scmp.ne.s32.totalorder %s123, %s139
      %p141 = scmp.eq.s32.totalorder %s26, 0
      %p142 = por %p140, %p141
      %s143 = ssub.s32 %s20, %s27
      %p144 = scmp.eq.s32.totalorder %s143, 0
      %s146 = sadd.s32 %s145, 1
      %s147 = scalar_select %p144, %s145, %s146
      %p150 = pneg %p144
      %p151 = scmp.eq.s32.totalorder %s20, 1
      %p152 = por %p150, %p151
      %p153 = scmp.ne.s32.totalorder %s145, %s148
      %p154 = scmp.eq.s32.totalorder %s20, 0
      %p155 = por %p153, %p154
      %p156 = scmp.ne.s32.totalorder %s145, %s148
      %p157 = scmp.eq.s32.totalorder %s25, 1
      %p158 = por %p156, %p157
      %p159 = scmp.ne.s32.totalorder %s148, %s149
      %p160 = scmp.eq.s32.totalorder %s25, 0
      %p161 = por %p159, %p160
      %p162 = scmp.ne.s32.totalorder %s148, %s149
      %p163 = scmp.eq.s32.totalorder %s26, 1
      %p164 = por %p162, %p163
      %p166 = scmp.ne.s32.totalorder %s149, %s165
      %p167 = scmp.eq.s32.totalorder %s26, 0
      %p168 = por %p166, %p167
      %s169 = ssub.s32 %s20, %s27
      %p170 = scmp.eq.s32.totalorder %s169, 0
      %s172 = sadd.s32 %s171, 1
      %s173 = scalar_select %p170, %s171, %s172
      %p176 = pneg %p170
      %p177 = scmp.eq.s32.totalorder %s20, 1
      %p178 = por %p176, %p177
      %p179 = scmp.ne.s32.totalorder %s171, %s174
      %p180 = scmp.eq.s32.totalorder %s20, 0
      %p181 = por %p179, %p180
      %p182 = scmp.ne.s32.totalorder %s171, %s174
      %p183 = scmp.eq.s32.totalorder %s25, 1
      %p184 = por %p182, %p183
      %p185 = scmp.ne.s32.totalorder %s174, %s175
      %p186 = scmp.eq.s32.totalorder %s25, 0
      %p187 = por %p185, %p186
      %p188 = scmp.ne.s32.totalorder %s174, %s175
      %p189 = scmp.eq.s32.totalorder %s26, 1
      %p190 = por %p188, %p189
      %p192 = scmp.ne.s32.totalorder %s175, %s191
      %p193 = scmp.eq.s32.totalorder %s26, 0
      %p194 = por %p192, %p193
      %s195 = ssub.s32 %s20, %s27
      %p196 = scmp.eq.s32.totalorder %s195, 0
      %s198 = sadd.s32 %s197, 1
      %s199 = scalar_select %p196, %s197, %s198
      %p202 = pneg %p196
      %p203 = scmp.eq.s32.totalorder %s20, 1
      %p204 = por %p202, %p203
      %p205 = scmp.ne.s32.totalorder %s197, %s200
      %p206 = scmp.eq.s32.totalorder %s20, 0
      %p207 = por %p205, %p206
      %p208 = scmp.ne.s32.totalorder %s197, %s200
      %p209 = scmp.eq.s32.totalorder %s25, 1
      %p210 = por %p208, %p209
      %p211 = scmp.ne.s32.totalorder %s200, %s201
      %p212 = scmp.eq.s32.totalorder %s25, 0
      %p213 = por %p211, %p212
      %p214 = scmp.ne.s32.totalorder %s200, %s201
      %p215 = scmp.eq.s32.totalorder %s26, 1
      %p216 = por %p214, %p215
      %p218 = scmp.ne.s32.totalorder %s201, %s217
      %p219 = scmp.eq.s32.totalorder %s26, 0
      %p220 = por %p218, %p219
      %p221 = scmp.le.s32.totalorder 1, %s20
      %p222 = scmp.lt.s32.totalorder %s20, 3
      %p223 = pnand %p221, %p222
      %p224 = pneg %p223
      // Predicated region
      $region9: #{tpu_custom_call.1} parent=5 // pred_check
        _
      $region10: #{tpu_custom_call.1} parent=5 // pred_check_branch
        %226 = sbr.rel (%p223) target = $region12
      $region11: #{tpu_custom_call.1} parent=5 // pred_region
        %s227 = ssub.s32 %s20, 1
        // Predicated region
        $region13: #{tpu_custom_call.1} parent=11 // pred_check
          %p228 = pneg %p67
        $region14: #{tpu_custom_call.1} parent=11 // pred_check_branch
          %230 = sbr.rel (%p228) target = $region16
        $region15: #{tpu_custom_call.1} parent=11 // pred_region
          _
        $region16: #{tpu_custom_call.1} parent=11 // pred_fallthru
          _
        // Predicated region
        $region17: #{tpu_custom_call.1} parent=11 // pred_check
          %p231 = pneg %p88
        $region18: #{tpu_custom_call.1} parent=11 // pred_check_branch
          %233 = sbr.rel (%p231) target = $region20
        $region19: #{tpu_custom_call.1} parent=11 // pred_region
          _
        $region20: #{tpu_custom_call.1} parent=11 // pred_fallthru
          _
        // Predicated region
        $region21: #{tpu_custom_call.1} parent=11 // pred_check
          %p234 = pneg %p109
        $region22: #{tpu_custom_call.1} parent=11 // pred_check_branch
          %236 = sbr.rel (%p234) target = $region24
        $region23: #{tpu_custom_call.1} parent=11 // pred_region
          _
        $region24: #{tpu_custom_call.1} parent=11 // pred_fallthru
          _
      $region12: #{tpu_custom_call.1} parent=5 // pred_fallthru
        _
      %p237 = scmp.lt.s32.totalorder %s20, 2
      // Predicated region
      $region25: #{tpu_custom_call.1} parent=5 // pred_check
        %p238 = pneg %p237
      $region26: #{tpu_custom_call.1} parent=5 // pred_check_branch
        %240 = sbr.rel (%p238) target = $region28
      $region27: #{tpu_custom_call.1} parent=5 // pred_region
        // Predicated region
        $region29: #{tpu_custom_call.1} parent=27 // pred_check
          %p241 = pneg %p40
        $region30: #{tpu_custom_call.1} parent=27 // pred_check_branch
          %243 = sbr.rel (%p241) target = $region32
        $region31: #{tpu_custom_call.1} parent=27 // pred_region
          %s244 = smul.u32 2, %s20
          %p245 = scmp.lt.s32.totalorder %s244, 3
          %s246 = scalar_select %p245, %s244, 3
          %s247 = smul.addr %s246, 4
          %s248 = scalar_lea.vmem %s0, %s247
          %s249 = smul.u32 2, %s20
        $region32: #{tpu_custom_call.1} parent=27 // pred_fallthru
          _
      $region28: #{tpu_custom_call.1} parent=5 // pred_fallthru
        _
      %p250 = scmp.le.s32.totalorder 1, %s20
      %p251 = scmp.lt.s32.totalorder %s20, 3
      %p252 = pnand %p250, %p251
      %p253 = pneg %p252
      // Predicated region
      $region33: #{tpu_custom_call.1} parent=5 // pred_check
        _
      $region34: #{tpu_custom_call.1} parent=5 // pred_check_branch
        %255 = sbr.rel (%p252) target = $region36
      $region35: #{tpu_custom_call.1} parent=5 // pred_region
        %s256 = ssub.s32 %s20, 1
        %s257 = smul.u32 2, %s25
        %p258 = scmp.lt.s32.totalorder %s257, 3
        %s259 = scalar_select %p258, %s257, 3
        %s260 = smul.addr %s259, 4
        %s261 = scalar_lea.vmem %s0, %s260
        %p262 = pneg %p46
        %p263 = pneg %p43
        %p264 = pneg %p67
        %p265 = pneg %p64
        %p266 = pneg %p88
        %p267 = pneg %p85
        %p268 = pneg %p109
        %p269 = pneg %p106
        %p270 = pneg %p135
        %p271 = pneg %p132
        %s272 = sand.u32 %s122, 1
        %s273 = scalar_lea.sflag [#allocation3], %s272
        %s274 = sand.u32 %s122, 1
        %s275 = smul.addr %s274, 8
        %s276 = scalar_lea.vmem [#allocation2], %s275
        %p277 = pneg %p161
        %p278 = pneg %p158
        %s279 = sand.u32 %s148, 1
        %s280 = scalar_lea.sflag [#allocation5], %s279
        %s281 = sand.u32 %s148, 1
        %s282 = smul.addr %s281, 2
        %s283 = scalar_lea.vmem [#allocation4], %s282
        %p284 = pneg %p187
        %p285 = pneg %p184
        %p286 = scmp.lt.s32.totalorder %s25, 1
        %s287 = scalar_select %p286, %s25, 1
        %s288 = scalar_lea.vmem %s6, %s287
        %p289 = pneg %p213
        %p290 = pneg %p210
        %p291 = scmp.lt.s32.totalorder %s25, 1
        %s292 = scalar_select %p291, %s25, 1
        %s293 = smul.addr %s292, 8
        %s294 = scalar_lea.vmem %s7, %s293
        %s295 = smul.u32 2, %s25
        %p296 = scmp.lt.s32.totalorder %s295, 3
        %s297 = scalar_select %p296, %s295, 3
        %s298 = smul.addr %s297, 4
        %s299 = scalar_lea.vmem %s0, %s298
        %s300 = smul.u32 2, %s25
        %s301 = smul.u32 2, %s25
        %s302 = smul.u32 2, %s25
        %p303 = scmp.lt.s32.totalorder %s25, 1
        %s304 = scalar_select %p303, %s25, 1
        %s305 = scalar_lea.vmem %s6, %s304
        %p306 = scmp.lt.s32.totalorder %s25, 1
        %s307 = scalar_select %p306, %s25, 1
        %s308 = smul.addr %s307, 8
        %s309 = scalar_lea.vmem %s7, %s308
        %v310 = vld [vmem:[%s299] sm:$0xff]
        %v311 = vld [vmem:[%s1] sm:$0xff]
        %v313 = vcombine.high %v310, %v310
        %vm314 = vcmask 31744
        %v316 = vsel %vm314, %v311, 0
        %vm318 = vcmask 1043456
        %v319 = vsel %vm318, %v310, 0
        %v321 = vsel %vm318, %v313, 0
        %323 = vmatprep.subr.mxu0 0.0
        %324 = vmatpush1.msra.mxu0 0.0
        %325 = vmatprep.subr.mxu0 0.0
        %326 = vmatpush1.msra.mxu0 0.0
        %327 = vmatprep.subr.mxu0 0.0
        %328 = vmatpush1.msra.mxu0 0.0
        %329 = vmatprep.subr.mxu0 0.0
        %330 = vmatpush1.msra.mxu0 0.0
        %331 = vmatprep.subr.mxu0 0.0
        %332 = vmatpush1.msra.mxu0 0.0
        %333 = vmatprep.subr.mxu0 0.0
        %334 = vmatpush1.msra.mxu0 0.0
        %335 = vmatprep.subr.mxu0 0.0
        %336 = vmatpush1.msra.mxu0 0.0
        %337 = vmatprep.subr.mxu0 0.0
        %338 = vmatpush1.msra.mxu0 0.0
        %339 = vmatprep.subr.mxu0 0.0
        %340 = vmatpush1.msra.mxu0 0.0
        %341 = vmatprep.subr.mxu0 0.0
        %342 = vmatpush1.msra.mxu0 0.0
        %343 = vmatprep.subr.mxu0 0.0
        %344 = vmatpush1.msra.mxu0 0.0
        %345 = vmatprep.subr.mxu0 0.0
        %346 = vmatpush1.msra.mxu0 0.0
        %347 = vmatprep.subr.mxu0 0.0
        %348 = vmatpush1.msra.mxu0 0.0
        %349 = vmatprep.subr.mxu0 0.0
        %350 = vmatpush1.msra.mxu0 0.0
        %351 = vmatprep.subr.mxu0 0.0
        %352 = vmatpush1.msra.mxu0 0.0
        %353 = vmatprep.subr.mxu0 %v321
        %354 = vmatpush1.msra.mxu0 %v319
        %355 = vmatprep.subr.mxu0 0.0
        %356 = vmatpush2.msra.mxu0 0.0
        %357 = vmatprep.subr.mxu0 0.0
        %358 = vmatpush2.msra.mxu0 0.0
        %359 = vmatprep.subr.mxu0 0.0
        %360 = vmatpush2.msra.mxu0 0.0
        %361 = vmatprep.subr.mxu0 0.0
        %362 = vmatpush2.msra.mxu0 0.0
        %363 = vmatprep.subr.mxu0 0.0
        %364 = vmatpush2.msra.mxu0 0.0
        %365 = vmatprep.subr.mxu0 0.0
        %366 = vmatpush2.msra.mxu0 0.0
        %367 = vmatprep.subr.mxu0 0.0
        %368 = vmatpush2.msra.mxu0 0.0
        %369 = vmatprep.subr.mxu0 0.0
        %370 = vmatpush2.msra.mxu0 0.0
        %371 = vmatprep.subr.mxu0 0.0
        %372 = vmatpush2.msra.mxu0 0.0
        %373 = vmatprep.subr.mxu0 0.0
        %374 = vmatpush2.msra.mxu0 0.0
        %375 = vmatprep.subr.mxu0 0.0
        %376 = vmatpush2.msra.mxu0 0.0
        %377 = vmatprep.subr.mxu0 0.0
        %378 = vmatpush2.msra.mxu0 0.0
        %379 = vmatprep.subr.mxu0 0.0
        %380 = vmatpush2.msra.mxu0 0.0
        %381 = vmatprep.subr.mxu0 0.0
        %382 = vmatpush2.msra.mxu0 0.0
        %383 = vmatprep.subr.mxu0 0.0
        %384 = vmatpush2.msra.mxu0 0.0
        %385 = vmatprep.subr.mxu0 0.0
        %386 = vmatpush2.msra.mxu0 0.0
        %387 = vmatprep.mubr.f32.mxu0 0.0
        %388 = vmatmul.mubr.f32.gmra.mxu0 %v316
        %v389 = vpop.f32.mrf.mxu0
        %v390 = vadd.f32 0.0, %v389
        %v391 = vpop.f32.mrf.mxu0
        %v392 = vadd.f32 0.0, %v391
        %393 = vdwg.mxu0
        %v394 = vld [vmem:[%s3] sm:$0xff]
        %v395 = vmul.f32 %v390, 2.0
        %v396 = vmul.f32 %v392, 2.0
        %398 = vset.pattern.permute.xlu0 0
        %399 = vperm.xlu0 %398, %v394
        %v400 = vpop.permute.xlu0 %399
        %v402 = vsub.f32 %v400, %v395
        %v403 = vsub.f32 %v400, %v396
        %v404 = vlaneseq
        %v405 = vshrl.u32 %v404, 7
        %v406 = vrot.slane %v402, 4
        %v407 = vmin.f32 %v402, %v406
        %v408 = vrot.slane %v407, 2
        %v409 = vmin.f32 %v407, %v408
        %v410 = vrot.slane %v409, 1
        %v411 = vmin.f32 %v409, %v410
        %v412 = vrot.slane %v403, 4
        %v413 = vmin.f32 %v403, %v412
        %v414 = vrot.slane %v413, 2
        %v415 = vmin.f32 %v413, %v414
        %v416 = vrot.slane %v415, 1
        %v417 = vmin.f32 %v415, %v416
        %vm418 = vcmp.eq.f32.partialorder %v402, %v411
        %vm419 = vcmp.eq.f32.partialorder %v403, %v417
        %v420 = vsel %vm418, %v405, 8
        %v421 = vsel %vm419, %v405, 8
        %v422 = vrot.slane %v420, 4
        %vm423 = vcmp.lt.s32.totalorder %v420, %v422
        %v424 = vsel %vm423, %v420, %v422
        %v425 = vrot.slane %v424, 2
        %vm426 = vcmp.lt.s32.totalorder %v424, %v425
        %v427 = vsel %vm426, %v424, %v425
        %v428 = vrot.slane %v427, 1
        %vm429 = vcmp.lt.s32.totalorder %v427, %v428
        %v430 = vsel %vm429, %v427, %v428
        %v431 = vrot.slane %v421, 4
        %vm432 = vcmp.lt.s32.totalorder %v421, %v431
        %v433 = vsel %vm432, %v421, %v431
        %v434 = vrot.slane %v433, 2
        %vm435 = vcmp.lt.s32.totalorder %v433, %v434
        %v436 = vsel %vm435, %v433, %v434
        %v437 = vrot.slane %v436, 1
        %vm438 = vcmp.lt.s32.totalorder %v436, %v437
        %v439 = vsel %vm438, %v436, %v437
        %vm440 = vcmp.lt.s32.totalorder %v430, 7
        %v441 = vsel %vm440, %v430, 7
        %vm442 = vcmp.lt.s32.totalorder %v439, 7
        %v443 = vsel %vm442, %v439, 7
        %v444 = vcombine.low %v441, %v443
        %v446 = vunpack.c.l.s4 1966171168
        %v447 = vunpack.c.0.s8 %v446
        %v448 = vlaneseq
        %v449 = vshrl.u32 %v448, 7
        %v450 = vsub.s32 %v447, %v449
        %v451 = vrot.slane %v444, %v450
        %v453 = vunpack.c.l.s4 1966171168
        %v454 = vunpack.c.0.s8 %v453
        %v455 = vlaneseq
        %v456 = vshrl.u32 %v455, 7
        %v457 = vsub.s32 %v454, %v456
        %v458 = vrot.slane %v451, %v457
        %v459 = vlaneseq
        %vm460 = vcmp.ge.s32.totalorder %v459, 0
        %vm461 = vcmp.lt.s32.totalorder %v459, 256
        %vm462 = vmand %vm460, %vm461
        %463 = vst.msk [vmem:[%s283] sm:$0x3] %vm462, %v458
        %vm464 = vcmp.eq.s32.totalorder %v405, %v441
        %vm465 = vcmp.eq.s32.totalorder %v405, %v443
        %v466 = vsel %vm464, 1, 0
        %v467 = vsel %vm465, 1, 0
        %v468 = vcvt.s32.f32 %v466
        %v469 = vcvt.s32.f32 %v467
        %v470 = vld [vmem:[%s2] sm:$0xf]
        %vm471 = vcmask 64512
        %v473 = vsel %vm471, %v470, 0
        %475 = vmatprep.subr.mxu0 0.0
        %476 = vmatpush1.msra.mxu0 0.0
        %477 = vmatprep.subr.mxu0 0.0
        %478 = vmatpush1.msra.mxu0 0.0
        %479 = vmatprep.subr.mxu0 0.0
        %480 = vmatpush1.msra.mxu0 0.0
        %481 = vmatprep.subr.mxu0 0.0
        %482 = vmatpush1.msra.mxu0 0.0
        %483 = vmatprep.subr.mxu0 0.0
        %484 = vmatpush1.msra.mxu0 0.0
        %485 = vmatprep.subr.mxu0 0.0
        %486 = vmatpush1.msra.mxu0 0.0
        %487 = vmatprep.subr.mxu0 0.0
        %488 = vmatpush1.msra.mxu0 0.0
        %489 = vmatprep.subr.mxu0 0.0
        %490 = vmatpush1.msra.mxu0 0.0
        %491 = vmatprep.subr.mxu0 0.0
        %492 = vmatpush1.msra.mxu0 0.0
        %493 = vmatprep.subr.mxu0 0.0
        %494 = vmatpush1.msra.mxu0 0.0
        %495 = vmatprep.subr.mxu0 0.0
        %496 = vmatpush1.msra.mxu0 0.0
        %497 = vmatprep.subr.mxu0 0.0
        %498 = vmatpush1.msra.mxu0 0.0
        %499 = vmatprep.subr.mxu0 0.0
        %500 = vmatpush1.msra.mxu0 0.0
        %501 = vmatprep.subr.mxu0 0.0
        %502 = vmatpush1.msra.mxu0 0.0
        %503 = vmatprep.subr.mxu0 0.0
        %504 = vmatpush1.msra.mxu0 0.0
        %505 = vmatprep.subr.mxu0 %v469
        %506 = vmatpush1.msra.mxu0 %v468
        %507 = vmatprep.subr.mxu0 0.0
        %508 = vmatpush2.msra.mxu0 0.0
        %509 = vmatprep.subr.mxu0 0.0
        %510 = vmatpush2.msra.mxu0 0.0
        %511 = vmatprep.subr.mxu0 0.0
        %512 = vmatpush2.msra.mxu0 0.0
        %513 = vmatprep.subr.mxu0 0.0
        %514 = vmatpush2.msra.mxu0 0.0
        %515 = vmatprep.subr.mxu0 0.0
        %516 = vmatpush2.msra.mxu0 0.0
        %517 = vmatprep.subr.mxu0 0.0
        %518 = vmatpush2.msra.mxu0 0.0
        %519 = vmatprep.subr.mxu0 0.0
        %520 = vmatpush2.msra.mxu0 0.0
        %521 = vmatprep.subr.mxu0 0.0
        %522 = vmatpush2.msra.mxu0 0.0
        %523 = vmatprep.subr.mxu0 0.0
        %524 = vmatpush2.msra.mxu0 0.0
        %525 = vmatprep.subr.mxu0 0.0
        %526 = vmatpush2.msra.mxu0 0.0
        %527 = vmatprep.subr.mxu0 0.0
        %528 = vmatpush2.msra.mxu0 0.0
        %529 = vmatprep.subr.mxu0 0.0
        %530 = vmatpush2.msra.mxu0 0.0
        %531 = vmatprep.subr.mxu0 0.0
        %532 = vmatpush2.msra.mxu0 0.0
        %533 = vmatprep.subr.mxu0 0.0
        %534 = vmatpush2.msra.mxu0 0.0
        %535 = vmatprep.subr.mxu0 0.0
        %536 = vmatpush2.msra.mxu0 0.0
        %537 = vmatprep.subr.mxu0 0.0
        %538 = vmatpush2.msra.mxu0 0.0
        %539 = vmatprep.mubr.f32.mxu0 0.0
        %540 = vmatmul.mubr.f32.gmra.mxu0 %v473
        %v541 = vpop.f32.mrf.mxu0
        %v542 = vadd.f32 0.0, %v541
        %v543 = vpop.f32.mrf.mxu0
        %v544 = vadd.f32 0.0, %v543
        %545 = vdwg.mxu0
        %v548 = vcombine.low %v542, %v544
        %550 = vst [vmem:[%s276] sm:$0xff] %v548
        %v552 = vsub.f32 %v542, %v310
        %v553 = vsub.f32 %v544, %v313
        %v554 = vmul.f32 %v552, %v552
        %v555 = vmul.f32 %v553, %v553
        %v556 = vsel %vm318, %v554, 0.0
        %v557 = vrot.slane %v556, 4
        %v558 = vadd.f32 %v556, %v557
        %v559 = vrot.slane %v558, 2
        %v560 = vadd.f32 %v558, %v559
        %v561 = vrot.slane %v560, 1
        %v562 = vadd.f32 %v560, %v561
        %v563 = vsel %vm318, %v555, 0.0
        %v564 = vrot.slane %v563, 4
        %v565 = vadd.f32 %v563, %v564
        %v566 = vrot.slane %v565, 2
        %v567 = vadd.f32 %v565, %v566
        %v568 = vrot.slane %v567, 1
        %v569 = vadd.f32 %v567, %v568
        %v570 = vadd.f32 %v562, %v569
        %571 = vadd.xlane.f32.xlu0 %v570
        %v572 = vpop.xlane.xlu0 %571
        %vm573 = vcmask 0
        %574 = vst.msk [vmem:[%s305] sm:$0x1] %vm573, %v572
        %v575 = vadd.f32 %v468, %v469
        %576 = vadd.xlane.f32.xlu0 %v575
        %v577 = vpop.xlane.xlu0 %576
        %vm578 = vcmask 7168
        %579 = vst.msk [vmem:[%s309] sm:$0xff] %vm578, %v577
        %s580 = sand.u32 %s122, 1
        %s581 = scalar_lea.sflag [#allocation3], %s580
        %s582 = sand.u32 %s122, 1
        %s583 = smul.addr %s582, 8
        %s584 = scalar_lea.vmem [#allocation2], %s583
        %s585 = sand.u32 %s148, 1
        %s586 = scalar_lea.sflag [#allocation5], %s585
        %s587 = sand.u32 %s148, 1
        %s588 = smul.addr %s587, 2
        %s589 = scalar_lea.vmem [#allocation4], %s588
        %p590 = scmp.lt.s32.totalorder %s25, 1
        %s591 = scalar_select %p590, %s25, 1
        %s592 = scalar_lea.vmem %s6, %s591
        %p593 = scmp.lt.s32.totalorder %s25, 1
        %s594 = scalar_select %p593, %s25, 1
        %s595 = smul.addr %s594, 8
        %s596 = scalar_lea.vmem %s7, %s595
        // Predicated region
        $region37: #{tpu_custom_call.1} parent=35 // pred_check
          %p597 = pneg %p132
        $region38: #{tpu_custom_call.1} parent=35 // pred_check_branch
          %599 = sbr.rel (%p597) target = $region40
        $region39: #{tpu_custom_call.1} parent=35 // pred_region
          %s600 = smul.u32 2, %s25
          %s602 = ssub.s32 128, 128
          %603 = vsyncadd %s581, %s602
          %s604 = smul.addr %s600, 64
          %s605 = scalar_lea.hbm %s4, %s604
          %s607 = sshll.u32 %s584, 4
          %s608 = int_to_ptr.vmem [resolvable:$true] %s607
          %610 = dma.vmem_to_hbm [thread:$0]  %s608, 128, %s605, %s581
        $region40: #{tpu_custom_call.1} parent=35 // pred_fallthru
          _
        // Predicated region
        $region41: #{tpu_custom_call.1} parent=35 // pred_check
          %p611 = pneg %p158
        $region42: #{tpu_custom_call.1} parent=35 // pred_check_branch
          %613 = sbr.rel (%p611) target = $region44
        $region43: #{tpu_custom_call.1} parent=35 // pred_region
          %s614 = smul.u32 2, %s25
          %s616 = ssub.s32 32, 32
          %617 = vsyncadd %s586, %s616
          %s618 = smul.addr %s614, 16
          %s619 = scalar_lea.hbm %s5, %s618
          %s621 = sshll.u32 %s589, 4
          %s622 = int_to_ptr.vmem [resolvable:$true] %s621
          %624 = dma.vmem_to_hbm [thread:$0]  %s622, 32, %s619, %s586
        $region44: #{tpu_custom_call.1} parent=35 // pred_fallthru
          _
        // Predicated region
        $region45: #{tpu_custom_call.1} parent=35 // pred_check
          %p625 = pneg %p184
        $region46: #{tpu_custom_call.1} parent=35 // pred_check_branch
          %627 = sbr.rel (%p625) target = $region48
        $region47: #{tpu_custom_call.1} parent=35 // pred_region
          _
        $region48: #{tpu_custom_call.1} parent=35 // pred_fallthru
          _
        // Predicated region
        $region49: #{tpu_custom_call.1} parent=35 // pred_check
          %p628 = pneg %p210
        $region50: #{tpu_custom_call.1} parent=35 // pred_check_branch
          %630 = sbr.rel (%p628) target = $region52
        $region51: #{tpu_custom_call.1} parent=35 // pred_region
          _
        $region52: #{tpu_custom_call.1} parent=35 // pred_fallthru
          _
      $region36: #{tpu_custom_call.1} parent=5 // pred_fallthru
        _
      %p631 = scmp.le.s32.totalorder 2, %s20
      // Predicated region
      $region53: #{tpu_custom_call.1} parent=5 // pred_check
        %p632 = pneg %p631
      $region54: #{tpu_custom_call.1} parent=5 // pred_check_branch
        %634 = sbr.rel (%p632) target = $region56
      $region55: #{tpu_custom_call.1} parent=5 // pred_region
        %s635 = ssub.s32 %s20, 2
        // Predicated region
        $region57: #{tpu_custom_call.1} parent=55 // pred_check
          %p636 = pneg %p138
        $region58: #{tpu_custom_call.1} parent=55 // pred_check_branch
          %638 = sbr.rel (%p636) target = $region60
        $region59: #{tpu_custom_call.1} parent=55 // pred_region
          %s639 = sand.u32 %s123, 1
          %s640 = scalar_lea.sflag [#allocation3], %s639
          %s641 = sand.u32 %s123, 1
          %s642 = smul.addr %s641, 8
          %s643 = scalar_lea.vmem [#allocation2], %s642
          %644 = dma.done %s640, 128
        $region60: #{tpu_custom_call.1} parent=55 // pred_fallthru
          _
        // Predicated region
        $region61: #{tpu_custom_call.1} parent=55 // pred_check
          %p645 = pneg %p164
        $region62: #{tpu_custom_call.1} parent=55 // pred_check_branch
          %647 = sbr.rel (%p645) target = $region64
        $region63: #{tpu_custom_call.1} parent=55 // pred_region
          %s648 = sand.u32 %s149, 1
          %s649 = scalar_lea.sflag [#allocation5], %s648
          %s650 = sand.u32 %s149, 1
          %s651 = smul.addr %s650, 2
          %s652 = scalar_lea.vmem [#allocation4], %s651
          %653 = dma.done %s649, 32
        $region64: #{tpu_custom_call.1} parent=55 // pred_fallthru
          _
        // Predicated region
        $region65: #{tpu_custom_call.1} parent=55 // pred_check
          %p654 = pneg %p190
        $region66: #{tpu_custom_call.1} parent=55 // pred_check_branch
          %656 = sbr.rel (%p654) target = $region68
        $region67: #{tpu_custom_call.1} parent=55 // pred_region
          %p657 = scmp.lt.s32.totalorder %s26, 1
          %s658 = scalar_select %p657, %s26, 1
          %s659 = scalar_lea.vmem %s6, %s658
        $region68: #{tpu_custom_call.1} parent=55 // pred_fallthru
          _
        // Predicated region
        $region69: #{tpu_custom_call.1} parent=55 // pred_check
          %p660 = pneg %p216
        $region70: #{tpu_custom_call.1} parent=55 // pred_check_branch
          %662 = sbr.rel (%p660) target = $region72
        $region71: #{tpu_custom_call.1} parent=55 // pred_region
          %p663 = scmp.lt.s32.totalorder %s26, 1
          %s664 = scalar_select %p663, %s26, 1
          %s665 = smul.addr %s664, 8
          %s666 = scalar_lea.vmem %s7, %s665
        $region72: #{tpu_custom_call.1} parent=55 // pred_fallthru
          _
      $region56: #{tpu_custom_call.1} parent=5 // pred_fallthru
        _
    $region6: #{tpu_custom_call.1} parent=1 // loop_footer
      %s24 = sadd.s32 1, %s20
    $region7: #{tpu_custom_call.1} parent=1 // loop_footer_branch
      %19 = sbr.rel target = $region3
    $region8: #{tpu_custom_call.1} parent=1 // loop_exit
      _
    %667 = vsyncpa [#allocation3], 1
    %s668 = scalar_lea.sflag [#allocation3], 1
    %669 = vsyncpa %s668, 1
    %670 = vsyncpa [#allocation5], 1
    %s671 = scalar_lea.sflag [#allocation5], 1
    %672 = vsyncpa %s671, 1

// kernel: tpu_custom_call.1
$region0: #{tpu_custom_call.1}
  #allocation0 [shape = 'u32[]', space=smem, size = 0x4, offset = 0x4, fixed_abs, tag = 'smem constant byte address 0x4 - core index']
  #allocation1 [shape = 'u32[144,128]{1,0:T(1,128)}', space=vmem, size = 0x12000, scoped, tag = 'internal scratch']
  %s0 = inlined_call_operand.vmem [shape: f32[4,512], index: 0, kind: input, shape index: {}]
  %s1 = inlined_call_operand.vmem [shape: f32[8,4], index: 1, kind: input, shape index: {}]
  %s2 = inlined_call_operand.vmem [shape: f32[4,8], index: 2, kind: input, shape index: {}]
  %s3 = inlined_call_operand.vmem [shape: f32[8,1], index: 3, kind: input, shape index: {}]
  %s4 = inlined_call_operand.hbm [shape: f32[4,512], index: 4, kind: output, shape index: {0}]
  %s5 = inlined_call_operand.hbm [shape: s32[1,512], index: 5, kind: output, shape index: {1}]
  %s6 = inlined_call_operand.vmem [shape: f32[2,1,1], index: 6, kind: output, shape index: {2}]
  %s7 = inlined_call_operand.vmem [shape: f32[2,8,1], index: 7, kind: output, shape index: {3}]
  %8 = xla_tuple %s4, %s5, %s6, %s7
  %s9 = sld [smem:[#allocation0]]
  $region73: #{tpu_custom_call.1} parent=0
    _
  %s11 = ssub.s32 1, %s9
  %s12 = scalar_select 0, %s11, %s9
  $region1: #{tpu_custom_call.1} parent=0
    #allocation2 [shape = 'u8[8192]{0}', space=vmem, size = 0x2000, scoped, tag = 'output window, operand 0']
    #allocation3 [shape = 's32[2]{0}', space=sflag, size = 0x8, scoped, tag = 'scoped memory for tpu_custom_call.1']
    #allocation4 [shape = 'u8[2048]{0}', space=vmem, size = 0x800, scoped, tag = 'output window, operand 1']
    #allocation5 [shape = 's32[2]{0}', space=sflag, size = 0x8, scoped, tag = 'scoped memory for tpu_custom_call.1']
    %13 = vsyncpa [#allocation3], 0
    %s14 = scalar_lea.sflag [#allocation3], 1
    %15 = vsyncpa %s14, 0
    %16 = vsyncpa [#allocation5], 0
    %s17 = scalar_lea.sflag [#allocation5], 1
    %18 = vsyncpa %s17, 0
    loop: start=0, step=1, limit=4
    $region2: #{tpu_custom_call.1} parent=1 // loop_pre_header
      _
    $region3: #{tpu_custom_call.1} parent=1 // loop_header
      %s20 = sphi 0, %s24
      %p21 = scmp.ge.s32.totalorder %s20, 4
      %s30 = sphi 0, %s32
      %s33 = sphi 0, %s30
      %s34 = sphi 0, %s33
      %s50 = sphi 0, %s34
      %s54 = sphi 0, %s54
      %s56 = sphi 0, %s54
      %s57 = sphi 0, %s56
      %s71 = sphi 0, %s57
      %s75 = sphi 0, %s75
      %s77 = sphi 0, %s75
      %s78 = sphi 0, %s77
      %s92 = sphi 0, %s78
      %s96 = sphi 0, %s96
      %s98 = sphi 0, %s96
      %s99 = sphi 0, %s98
      %s113 = sphi 0, %s99
      %s119 = sphi 0, %s121
      %s122 = sphi 0, %s119
      %s123 = sphi 0, %s122
      %s139 = sphi 0, %s123
      %s145 = sphi 0, %s147
      %s148 = sphi 0, %s145
      %s149 = sphi 0, %s148
      %s165 = sphi 0, %s149
      %s171 = sphi 0, %s173
      %s174 = sphi 0, %s171
      %s175 = sphi 0, %s174
      %s191 = sphi 0, %s175
      %s197 = sphi 0, %s199
      %s200 = sphi 0, %s197
      %s201 = sphi 0, %s200
      %s217 = sphi 0, %s201
    $region4: #{tpu_custom_call.1} parent=1 // loop_header_branch
      %23 = sbr.rel (%p21) target = $region8
    $region5: #{tpu_custom_call.1} parent=1 // loop_body
      %s25 = ssub.s32 %s20, 1
      %s26 = ssub.s32 %s20, 2
      %s27 = sadd.s32 %s20, 1
      %s28 = ssub.s32 %s20, %s27
      %p29 = scmp.eq.s32.totalorder %s28, 0
      %s31 = sadd.s32 %s30, 1
      %s32 = scalar_select %p29, %s30, %s31
      %p35 = pneg %p29
      %p36 = scmp.eq.s32.totalorder %s20, 1
      %p37 = por %p35, %p36
      %p38 = scmp.ne.s32.totalorder %s30, %s33
      %p39 = scmp.eq.s32.totalorder %s20, 0
      %p40 = por %p38, %p39
      %p41 = scmp.ne.s32.totalorder %s30, %s33
      %p42 = scmp.eq.s32.totalorder %s25, 1
      %p43 = por %p41, %p42
      %p44 = scmp.ne.s32.totalorder %s33, %s34
      %p45 = scmp.eq.s32.totalorder %s25, 0
      %p46 = por %p44, %p45
      %p47 = scmp.ne.s32.totalorder %s33, %s34
      %p48 = scmp.eq.s32.totalorder %s26, 1
      %p49 = por %p47, %p48
      %p51 = scmp.ne.s32.totalorder %s34, %s50
      %p52 = scmp.eq.s32.totalorder %s26, 0
      %p53 = por %p51, %p52
      %s55 = sadd.s32 %s54, 1
      %p58 = scmp.eq.s32.totalorder %s20, 1
      %p59 = scmp.ne.s32.totalorder %s54, %s56
      %p60 = scmp.eq.s32.totalorder %s20, 0
      %p61 = por %p59, %p60
      %p62 = scmp.ne.s32.totalorder %s54, %s56
      %p63 = scmp.eq.s32.totalorder %s25, 1
      %p64 = por %p62, %p63
      %p65 = scmp.ne.s32.totalorder %s56, %s57
      %p66 = scmp.eq.s32.totalorder %s25, 0
      %p67 = por %p65, %p66
      %p68 = scmp.ne.s32.totalorder %s56, %s57
      %p69 = scmp.eq.s32.totalorder %s26, 1
      %p70 = por %p68, %p69
      %p72 = scmp.ne.s32.totalorder %s57, %s71
      %p73 = scmp.eq.s32.totalorder %s26, 0
      %p74 = por %p72, %p73
      %s76 = sadd.s32 %s75, 1
      %p79 = scmp.eq.s32.totalorder %s20, 1
      %p80 = scmp.ne.s32.totalorder %s75, %s77
      %p81 = scmp.eq.s32.totalorder %s20, 0
      %p82 = por %p80, %p81
      %p83 = scmp.ne.s32.totalorder %s75, %s77
      %p84 = scmp.eq.s32.totalorder %s25, 1
      %p85 = por %p83, %p84
      %p86 = scmp.ne.s32.totalorder %s77, %s78
      %p87 = scmp.eq.s32.totalorder %s25, 0
      %p88 = por %p86, %p87
      %p89 = scmp.ne.s32.totalorder %s77, %s78
      %p90 = scmp.eq.s32.totalorder %s26, 1
      %p91 = por %p89, %p90
      %p93 = scmp.ne.s32.totalorder %s78, %s92
      %p94 = scmp.eq.s32.totalorder %s26, 0
      %p95 = por %p93, %p94
      %s97 = sadd.s32 %s96, 1
      %p100 = scmp.eq.s32.totalorder %s20, 1
      %p101 = scmp.ne.s32.totalorder %s96, %s98
      %p102 = scmp.eq.s32.totalorder %s20, 0
      %p103 = por %p101, %p102
      %p104 = scmp.ne.s32.totalorder %s96, %s98
      %p105 = scmp.eq.s32.totalorder %s25, 1
      %p106 = por %p104, %p105
      %p107 = scmp.ne.s32.totalorder %s98, %s99
      %p108 = scmp.eq.s32.totalorder %s25, 0
      %p109 = por %p107, %p108
      %p110 = scmp.ne.s32.totalorder %s98, %s99
      %p111 = scmp.eq.s32.totalorder %s26, 1
      %p112 = por %p110, %p111
      %p114 = scmp.ne.s32.totalorder %s99, %s113
      %p115 = scmp.eq.s32.totalorder %s26, 0
      %p116 = por %p114, %p115
      %s117 = ssub.s32 %s20, %s27
      %p118 = scmp.eq.s32.totalorder %s117, 0
      %s120 = sadd.s32 %s119, 1
      %s121 = scalar_select %p118, %s119, %s120
      %p124 = pneg %p118
      %p125 = scmp.eq.s32.totalorder %s20, 1
      %p126 = por %p124, %p125
      %p127 = scmp.ne.s32.totalorder %s119, %s122
      %p128 = scmp.eq.s32.totalorder %s20, 0
      %p129 = por %p127, %p128
      %p130 = scmp.ne.s32.totalorder %s119, %s122
      %p131 = scmp.eq.s32.totalorder %s25, 1
      %p132 = por %p130, %p131
      %p133 = scmp.ne.s32.totalorder %s122, %s123
      %p134 = scmp.eq.s32.totalorder %s25, 0
      %p135 = por %p133, %p134
      %p136 = scmp.ne.s32.totalorder %s122, %s123
      %p137 = scmp.eq.s32.totalorder %s26, 1
      %p138 = por %p136, %p137
      %p140 = scmp.ne.s32.totalorder %s123, %s139
      %p141 = scmp.eq.s32.totalorder %s26, 0
      %p142 = por %p140, %p141
      %s143 = ssub.s32 %s20, %s27
      %p144 = scmp.eq.s32.totalorder %s143, 0
      %s146 = sadd.s32 %s145, 1
      %s147 = scalar_select %p144, %s145, %s146
      %p150 = pneg %p144
      %p151 = scmp.eq.s32.totalorder %s20, 1
      %p152 = por %p150, %p151
      %p153 = scmp.ne.s32.totalorder %s145, %s148
      %p154 = scmp.eq.s32.totalorder %s20, 0
      %p155 = por %p153, %p154
      %p156 = scmp.ne.s32.totalorder %s145, %s148
      %p157 = scmp.eq.s32.totalorder %s25, 1
      %p158 = por %p156, %p157
      %p159 = scmp.ne.s32.totalorder %s148, %s149
      %p160 = scmp.eq.s32.totalorder %s25, 0
      %p161 = por %p159, %p160
      %p162 = scmp.ne.s32.totalorder %s148, %s149
      %p163 = scmp.eq.s32.totalorder %s26, 1
      %p164 = por %p162, %p163
      %p166 = scmp.ne.s32.totalorder %s149, %s165
      %p167 = scmp.eq.s32.totalorder %s26, 0
      %p168 = por %p166, %p167
      %s169 = ssub.s32 %s20, %s27
      %p170 = scmp.eq.s32.totalorder %s169, 0
      %s172 = sadd.s32 %s171, 1
      %s173 = scalar_select %p170, %s171, %s172
      %p176 = pneg %p170
      %p177 = scmp.eq.s32.totalorder %s20, 1
      %p178 = por %p176, %p177
      %p179 = scmp.ne.s32.totalorder %s171, %s174
      %p180 = scmp.eq.s32.totalorder %s20, 0
      %p181 = por %p179, %p180
      %p182 = scmp.ne.s32.totalorder %s171, %s174
      %p183 = scmp.eq.s32.totalorder %s25, 1
      %p184 = por %p182, %p183
      %p185 = scmp.ne.s32.totalorder %s174, %s175
      %p186 = scmp.eq.s32.totalorder %s25, 0
      %p187 = por %p185, %p186
      %p188 = scmp.ne.s32.totalorder %s174, %s175
      %p189 = scmp.eq.s32.totalorder %s26, 1
      %p190 = por %p188, %p189
      %p192 = scmp.ne.s32.totalorder %s175, %s191
      %p193 = scmp.eq.s32.totalorder %s26, 0
      %p194 = por %p192, %p193
      %s195 = ssub.s32 %s20, %s27
      %p196 = scmp.eq.s32.totalorder %s195, 0
      %s198 = sadd.s32 %s197, 1
      %s199 = scalar_select %p196, %s197, %s198
      %p202 = pneg %p196
      %p203 = scmp.eq.s32.totalorder %s20, 1
      %p204 = por %p202, %p203
      %p205 = scmp.ne.s32.totalorder %s197, %s200
      %p206 = scmp.eq.s32.totalorder %s20, 0
      %p207 = por %p205, %p206
      %p208 = scmp.ne.s32.totalorder %s197, %s200
      %p209 = scmp.eq.s32.totalorder %s25, 1
      %p210 = por %p208, %p209
      %p211 = scmp.ne.s32.totalorder %s200, %s201
      %p212 = scmp.eq.s32.totalorder %s25, 0
      %p213 = por %p211, %p212
      %p214 = scmp.ne.s32.totalorder %s200, %s201
      %p215 = scmp.eq.s32.totalorder %s26, 1
      %p216 = por %p214, %p215
      %p218 = scmp.ne.s32.totalorder %s201, %s217
      %p219 = scmp.eq.s32.totalorder %s26, 0
      %p220 = por %p218, %p219
      %p221 = scmp.le.s32.totalorder 1, %s20
      %p222 = scmp.lt.s32.totalorder %s20, 3
      %p223 = pnand %p221, %p222
      %p224 = pneg %p223
      // Predicated region
      $region9: #{tpu_custom_call.1} parent=5 // pred_check
        _
      $region10: #{tpu_custom_call.1} parent=5 // pred_check_branch
        %226 = sbr.rel (%p223) target = $region12
      $region11: #{tpu_custom_call.1} parent=5 // pred_region
        %s227 = ssub.s32 %s20, 1
        // Predicated region
        $region13: #{tpu_custom_call.1} parent=11 // pred_check
          %p228 = pneg %p67
        $region14: #{tpu_custom_call.1} parent=11 // pred_check_branch
          %230 = sbr.rel (%p228) target = $region16
        $region15: #{tpu_custom_call.1} parent=11 // pred_region
          _
        $region16: #{tpu_custom_call.1} parent=11 // pred_fallthru
          _
        // Predicated region
        $region17: #{tpu_custom_call.1} parent=11 // pred_check
          %p231 = pneg %p88
        $region18: #{tpu_custom_call.1} parent=11 // pred_check_branch
          %233 = sbr.rel (%p231) target = $region20
        $region19: #{tpu_custom_call.1} parent=11 // pred_region
          _
        $region20: #{tpu_custom_call.1} parent=11 // pred_fallthru
          _
        // Predicated region
        $region21: #{tpu_custom_call.1} parent=11 // pred_check
          %p234 = pneg %p109
        $region22: #{tpu_custom_call.1} parent=11 // pred_check_branch
          %236 = sbr.rel (%p234) target = $region24
        $region23: #{tpu_custom_call.1} parent=11 // pred_region
          _
        $region24: #{tpu_custom_call.1} parent=11 // pred_fallthru
          _
      $region12: #{tpu_custom_call.1} parent=5 // pred_fallthru
        _
      %p237 = scmp.lt.s32.totalorder %s20, 2
      // Predicated region
      $region25: #{tpu_custom_call.1} parent=5 // pred_check
        %p238 = pneg %p237
      $region26: #{tpu_custom_call.1} parent=5 // pred_check_branch
        %240 = sbr.rel (%p238) target = $region28
      $region27: #{tpu_custom_call.1} parent=5 // pred_region
        // Predicated region
        $region29: #{tpu_custom_call.1} parent=27 // pred_check
          %p241 = pneg %p40
        $region30: #{tpu_custom_call.1} parent=27 // pred_check_branch
          %243 = sbr.rel (%p241) target = $region32
        $region31: #{tpu_custom_call.1} parent=27 // pred_region
          %s244 = smul.u32 2, %s20
          %p245 = scmp.lt.s32.totalorder %s244, 3
          %s246 = scalar_select %p245, %s244, 3
          %s247 = smul.addr %s246, 4
          %s248 = scalar_lea.vmem %s0, %s247
          %s249 = smul.u32 2, %s20
        $region32: #{tpu_custom_call.1} parent=27 // pred_fallthru
          _
      $region28: #{tpu_custom_call.1} parent=5 // pred_fallthru
        _
      %p250 = scmp.le.s32.totalorder 1, %s20
      %p251 = scmp.lt.s32.totalorder %s20, 3
      %p252 = pnand %p250, %p251
      %p253 = pneg %p252
      // Predicated region
      $region33: #{tpu_custom_call.1} parent=5 // pred_check
        _
      $region34: #{tpu_custom_call.1} parent=5 // pred_check_branch
        %255 = sbr.rel (%p252) target = $region36
      $region35: #{tpu_custom_call.1} parent=5 // pred_region
        %s256 = ssub.s32 %s20, 1
        %s257 = smul.u32 2, %s25
        %p258 = scmp.lt.s32.totalorder %s257, 3
        %s259 = scalar_select %p258, %s257, 3
        %s260 = smul.addr %s259, 4
        %s261 = scalar_lea.vmem %s0, %s260
        %p262 = pneg %p46
        %p263 = pneg %p43
        %p264 = pneg %p67
        %p265 = pneg %p64
        %p266 = pneg %p88
        %p267 = pneg %p85
        %p268 = pneg %p109
        %p269 = pneg %p106
        %p270 = pneg %p135
        %p271 = pneg %p132
        %s272 = sand.u32 %s122, 1
        %s273 = scalar_lea.sflag [#allocation3], %s272
        %s274 = sand.u32 %s122, 1
        %s275 = smul.addr %s274, 8
        %s276 = scalar_lea.vmem [#allocation2], %s275
        %p277 = pneg %p161
        %p278 = pneg %p158
        %s279 = sand.u32 %s148, 1
        %s280 = scalar_lea.sflag [#allocation5], %s279
        %s281 = sand.u32 %s148, 1
        %s282 = smul.addr %s281, 2
        %s283 = scalar_lea.vmem [#allocation4], %s282
        %p284 = pneg %p187
        %p285 = pneg %p184
        %p286 = scmp.lt.s32.totalorder %s25, 1
        %s287 = scalar_select %p286, %s25, 1
        %s288 = scalar_lea.vmem %s6, %s287
        %p289 = pneg %p213
        %p290 = pneg %p210
        %p291 = scmp.lt.s32.totalorder %s25, 1
        %s292 = scalar_select %p291, %s25, 1
        %s293 = smul.addr %s292, 8
        %s294 = scalar_lea.vmem %s7, %s293
        %s295 = smul.u32 2, %s25
        %p296 = scmp.lt.s32.totalorder %s295, 3
        %s297 = scalar_select %p296, %s295, 3
        %s298 = smul.addr %s297, 4
        %s299 = scalar_lea.vmem %s0, %s298
        %s300 = smul.u32 2, %s25
        %s301 = smul.u32 2, %s25
        %s302 = smul.u32 2, %s25
        %p303 = scmp.lt.s32.totalorder %s25, 1
        %s304 = scalar_select %p303, %s25, 1
        %s305 = scalar_lea.vmem %s6, %s304
        %p306 = scmp.lt.s32.totalorder %s25, 1
        %s307 = scalar_select %p306, %s25, 1
        %s308 = smul.addr %s307, 8
        %s309 = scalar_lea.vmem %s7, %s308
        %v310 = vld [vmem:[%s299] sm:$0xff]
        %v311 = vld [vmem:[%s1] sm:$0xff]
        %v313 = vcombine.high %v310, %v310
        %vm314 = vcmask 31744
        %v316 = vsel %vm314, %v311, 0
        %vm318 = vcmask 1043456
        %v319 = vsel %vm318, %v310, 0
        %v321 = vsel %vm318, %v313, 0
        %323 = vmatprep.subr.mxu0 0.0
        %324 = vmatpush1.msra.mxu0 0.0
        %325 = vmatprep.subr.mxu0 0.0
        %326 = vmatpush1.msra.mxu0 0.0
        %327 = vmatprep.subr.mxu0 0.0
        %328 = vmatpush1.msra.mxu0 0.0
        %329 = vmatprep.subr.mxu0 0.0
        %330 = vmatpush1.msra.mxu0 0.0
        %331 = vmatprep.subr.mxu0 0.0
        %332 = vmatpush1.msra.mxu0 0.0
        %333 = vmatprep.subr.mxu0 0.0
        %334 = vmatpush1.msra.mxu0 0.0
        %335 = vmatprep.subr.mxu0 0.0
        %336 = vmatpush1.msra.mxu0 0.0
        %337 = vmatprep.subr.mxu0 0.0
        %338 = vmatpush1.msra.mxu0 0.0
        %339 = vmatprep.subr.mxu0 0.0
        %340 = vmatpush1.msra.mxu0 0.0
        %341 = vmatprep.subr.mxu0 0.0
        %342 = vmatpush1.msra.mxu0 0.0
        %343 = vmatprep.subr.mxu0 0.0
        %344 = vmatpush1.msra.mxu0 0.0
        %345 = vmatprep.subr.mxu0 0.0
        %346 = vmatpush1.msra.mxu0 0.0
        %347 = vmatprep.subr.mxu0 0.0
        %348 = vmatpush1.msra.mxu0 0.0
        %349 = vmatprep.subr.mxu0 0.0
        %350 = vmatpush1.msra.mxu0 0.0
        %351 = vmatprep.subr.mxu0 0.0
        %352 = vmatpush1.msra.mxu0 0.0
        %353 = vmatprep.subr.mxu0 %v321
        %354 = vmatpush1.msra.mxu0 %v319
        %355 = vmatprep.subr.mxu0 0.0
        %356 = vmatpush2.msra.mxu0 0.0
        %357 = vmatprep.subr.mxu0 0.0
        %358 = vmatpush2.msra.mxu0 0.0
        %359 = vmatprep.subr.mxu0 0.0
        %360 = vmatpush2.msra.mxu0 0.0
        %361 = vmatprep.subr.mxu0 0.0
        %362 = vmatpush2.msra.mxu0 0.0
        %363 = vmatprep.subr.mxu0 0.0
        %364 = vmatpush2.msra.mxu0 0.0
        %365 = vmatprep.subr.mxu0 0.0
        %366 = vmatpush2.msra.mxu0 0.0
        %367 = vmatprep.subr.mxu0 0.0
        %368 = vmatpush2.msra.mxu0 0.0
        %369 = vmatprep.subr.mxu0 0.0
        %370 = vmatpush2.msra.mxu0 0.0
        %371 = vmatprep.subr.mxu0 0.0
        %372 = vmatpush2.msra.mxu0 0.0
        %373 = vmatprep.subr.mxu0 0.0
        %374 = vmatpush2.msra.mxu0 0.0
        %375 = vmatprep.subr.mxu0 0.0
        %376 = vmatpush2.msra.mxu0 0.0
        %377 = vmatprep.subr.mxu0 0.0
        %378 = vmatpush2.msra.mxu0 0.0
        %379 = vmatprep.subr.mxu0 0.0
        %380 = vmatpush2.msra.mxu0 0.0
        %381 = vmatprep.subr.mxu0 0.0
        %382 = vmatpush2.msra.mxu0 0.0
        %383 = vmatprep.subr.mxu0 0.0
        %384 = vmatpush2.msra.mxu0 0.0
        %385 = vmatprep.subr.mxu0 0.0
        %386 = vmatpush2.msra.mxu0 0.0
        %387 = vmatprep.mubr.f32.mxu0 0.0
        %388 = vmatmul.mubr.f32.gmra.mxu0 %v316
        %v389 = vpop.f32.mrf.mxu0
        %v390 = vadd.f32 0.0, %v389
        %v391 = vpop.f32.mrf.mxu0
        %v392 = vadd.f32 0.0, %v391
        %393 = vdwg.mxu0
        %v394 = vld [vmem:[%s3] sm:$0xff]
        %v395 = vmul.f32 %v390, 2.0
        %v396 = vmul.f32 %v392, 2.0
        %398 = vset.pattern.permute.xlu0 0
        %399 = vperm.xlu0 %398, %v394
        %v400 = vpop.permute.xlu0 %399
        %v402 = vsub.f32 %v400, %v395
        %v403 = vsub.f32 %v400, %v396
        %v404 = vlaneseq
        %v405 = vshrl.u32 %v404, 7
        %v406 = vrot.slane %v402, 4
        %v407 = vmin.f32 %v402, %v406
        %v408 = vrot.slane %v407, 2
        %v409 = vmin.f32 %v407, %v408
        %v410 = vrot.slane %v409, 1
        %v411 = vmin.f32 %v409, %v410
        %v412 = vrot.slane %v403, 4
        %v413 = vmin.f32 %v403, %v412
        %v414 = vrot.slane %v413, 2
        %v415 = vmin.f32 %v413, %v414
        %v416 = vrot.slane %v415, 1
        %v417 = vmin.f32 %v415, %v416
        %vm418 = vcmp.eq.f32.partialorder %v402, %v411
        %vm419 = vcmp.eq.f32.partialorder %v403, %v417
        %v420 = vsel %vm418, %v405, 8
        %v421 = vsel %vm419, %v405, 8
        %v422 = vrot.slane %v420, 4
        %vm423 = vcmp.lt.s32.totalorder %v420, %v422
        %v424 = vsel %vm423, %v420, %v422
        %v425 = vrot.slane %v424, 2
        %vm426 = vcmp.lt.s32.totalorder %v424, %v425
        %v427 = vsel %vm426, %v424, %v425
        %v428 = vrot.slane %v427, 1
        %vm429 = vcmp.lt.s32.totalorder %v427, %v428
        %v430 = vsel %vm429, %v427, %v428
        %v431 = vrot.slane %v421, 4
        %vm432 = vcmp.lt.s32.totalorder %v421, %v431
        %v433 = vsel %vm432, %v421, %v431
        %v434 = vrot.slane %v433, 2
        %vm435 = vcmp.lt.s32.totalorder %v433, %v434
        %v436 = vsel %vm435, %v433, %v434
        %v437 = vrot.slane %v436, 1
        %vm438 = vcmp.lt.s32.totalorder %v436, %v437
        %v439 = vsel %vm438, %v436, %v437
        %vm440 = vcmp.lt.s32.totalorder %v430, 7
        %v441 = vsel %vm440, %v430, 7
        %vm442 = vcmp.lt.s32.totalorder %v439, 7
        %v443 = vsel %vm442, %v439, 7
        %v444 = vcombine.low %v441, %v443
        %v446 = vunpack.c.l.s4 1966171168
        %v447 = vunpack.c.0.s8 %v446
        %v448 = vlaneseq
        %v449 = vshrl.u32 %v448, 7
        %v450 = vsub.s32 %v447, %v449
        %v451 = vrot.slane %v444, %v450
        %v453 = vunpack.c.l.s4 1966171168
        %v454 = vunpack.c.0.s8 %v453
        %v455 = vlaneseq
        %v456 = vshrl.u32 %v455, 7
        %v457 = vsub.s32 %v454, %v456
        %v458 = vrot.slane %v451, %v457
        %v459 = vlaneseq
        %vm460 = vcmp.ge.s32.totalorder %v459, 0
        %vm461 = vcmp.lt.s32.totalorder %v459, 256
        %vm462 = vmand %vm460, %vm461
        %463 = vst.msk [vmem:[%s283] sm:$0x3] %vm462, %v458
        %vm464 = vcmp.eq.s32.totalorder %v405, %v441
        %vm465 = vcmp.eq.s32.totalorder %v405, %v443
        %v466 = vsel %vm464, 1, 0
        %v467 = vsel %vm465, 1, 0
        %v468 = vcvt.s32.f32 %v466
        %v469 = vcvt.s32.f32 %v467
        %v470 = vld [vmem:[%s2] sm:$0xf]
        %vm471 = vcmask 64512
        %v473 = vsel %vm471, %v470, 0
        %475 = vmatprep.subr.mxu0 0.0
        %476 = vmatpush1.msra.mxu0 0.0
        %477 = vmatprep.subr.mxu0 0.0
        %478 = vmatpush1.msra.mxu0 0.0
        %479 = vmatprep.subr.mxu0 0.0
        %480 = vmatpush1.msra.mxu0 0.0
        %481 = vmatprep.subr.mxu0 0.0
        %482 = vmatpush1.msra.mxu0 0.0
        %483 = vmatprep.subr.mxu0 0.0
        %484 = vmatpush1.msra.mxu0 0.0
        %485 = vmatprep.subr.mxu0 0.0
        %486 = vmatpush1.msra.mxu0 0.0
        %487 = vmatprep.subr.mxu0 0.0
        %488 = vmatpush1.msra.mxu0 0.0
        %489 = vmatprep.subr.mxu0 0.0
        %490 = vmatpush1.msra.mxu0 0.0
        %491 = vmatprep.subr.mxu0 0.0
        %492 = vmatpush1.msra.mxu0 0.0
        %493 = vmatprep.subr.mxu0 0.0
        %494 = vmatpush1.msra.mxu0 0.0
        %495 = vmatprep.subr.mxu0 0.0
        %496 = vmatpush1.msra.mxu0 0.0
        %497 = vmatprep.subr.mxu0 0.0
        %498 = vmatpush1.msra.mxu0 0.0
        %499 = vmatprep.subr.mxu0 0.0
        %500 = vmatpush1.msra.mxu0 0.0
        %501 = vmatprep.subr.mxu0 0.0
        %502 = vmatpush1.msra.mxu0 0.0
        %503 = vmatprep.subr.mxu0 0.0
        %504 = vmatpush1.msra.mxu0 0.0
        %505 = vmatprep.subr.mxu0 %v469
        %506 = vmatpush1.msra.mxu0 %v468
        %507 = vmatprep.subr.mxu0 0.0
        %508 = vmatpush2.msra.mxu0 0.0
        %509 = vmatprep.subr.mxu0 0.0
        %510 = vmatpush2.msra.mxu0 0.0
        %511 = vmatprep.subr.mxu0 0.0
        %512 = vmatpush2.msra.mxu0 0.0
        %513 = vmatprep.subr.mxu0 0.0
        %514 = vmatpush2.msra.mxu0 0.0
        %515 = vmatprep.subr.mxu0 0.0
        %516 = vmatpush2.msra.mxu0 0.0
        %517 = vmatprep.subr.mxu0 0.0
        %518 = vmatpush2.msra.mxu0 0.0
        %519 = vmatprep.subr.mxu0 0.0
        %520 = vmatpush2.msra.mxu0 0.0
        %521 = vmatprep.subr.mxu0 0.0
        %522 = vmatpush2.msra.mxu0 0.0
        %523 = vmatprep.subr.mxu0 0.0
        %524 = vmatpush2.msra.mxu0 0.0
        %525 = vmatprep.subr.mxu0 0.0
        %526 = vmatpush2.msra.mxu0 0.0
        %527 = vmatprep.subr.mxu0 0.0
        %528 = vmatpush2.msra.mxu0 0.0
        %529 = vmatprep.subr.mxu0 0.0
        %530 = vmatpush2.msra.mxu0 0.0
        %531 = vmatprep.subr.mxu0 0.0
        %532 = vmatpush2.msra.mxu0 0.0
        %533 = vmatprep.subr.mxu0 0.0
        %534 = vmatpush2.msra.mxu0 0.0
        %535 = vmatprep.subr.mxu0 0.0
        %536 = vmatpush2.msra.mxu0 0.0
        %537 = vmatprep.subr.mxu0 0.0
        %538 = vmatpush2.msra.mxu0 0.0
        %539 = vmatprep.mubr.f32.mxu0 0.0
        %540 = vmatmul.mubr.f32.gmra.mxu0 %v473
        %v541 = vpop.f32.mrf.mxu0
        %v542 = vadd.f32 0.0, %v541
        %v543 = vpop.f32.mrf.mxu0
        %v544 = vadd.f32 0.0, %v543
        %545 = vdwg.mxu0
        %v548 = vcombine.low %v542, %v544
        %550 = vst [vmem:[%s276] sm:$0xff] %v548
        %v552 = vsub.f32 %v542, %v310
        %v553 = vsub.f32 %v544, %v313
        %v554 = vmul.f32 %v552, %v552
        %v555 = vmul.f32 %v553, %v553
        %v556 = vsel %vm318, %v554, 0.0
        %v557 = vrot.slane %v556, 4
        %v558 = vadd.f32 %v556, %v557
        %v559 = vrot.slane %v558, 2
        %v560 = vadd.f32 %v558, %v559
        %v561 = vrot.slane %v560, 1
        %v562 = vadd.f32 %v560, %v561
        %v563 = vsel %vm318, %v555, 0.0
        %v564 = vrot.slane %v563, 4
        %v565 = vadd.f32 %v563, %v564
        %v566 = vrot.slane %v565, 2
        %v567 = vadd.f32 %v565, %v566
        %v568 = vrot.slane %v567, 1
        %v569 = vadd.f32 %v567, %v568
        %v570 = vadd.f32 %v562, %v569
        %571 = vadd.xlane.f32.xlu0 %v570
        %v572 = vpop.xlane.xlu0 %571
        %vm573 = vcmask 0
        %574 = vst.msk [vmem:[%s305] sm:$0x1] %vm573, %v572
        %v575 = vadd.f32 %v468, %v469
        %576 = vadd.xlane.f32.xlu0 %v575
        %v577 = vpop.xlane.xlu0 %576
        %vm578 = vcmask 7168
        %579 = vst.msk [vmem:[%s309] sm:$0xff] %vm578, %v577
        %s580 = sand.u32 %s122, 1
        %s581 = scalar_lea.sflag [#allocation3], %s580
        %s582 = sand.u32 %s122, 1
        %s583 = smul.addr %s582, 8
        %s584 = scalar_lea.vmem [#allocation2], %s583
        %s585 = sand.u32 %s148, 1
        %s586 = scalar_lea.sflag [#allocation5], %s585
        %s587 = sand.u32 %s148, 1
        %s588 = smul.addr %s587, 2
        %s589 = scalar_lea.vmem [#allocation4], %s588
        %p590 = scmp.lt.s32.totalorder %s25, 1
        %s591 = scalar_select %p590, %s25, 1
        %s592 = scalar_lea.vmem %s6, %s591
        %p593 = scmp.lt.s32.totalorder %s25, 1
        %s594 = scalar_select %p593, %s25, 1
        %s595 = smul.addr %s594, 8
        %s596 = scalar_lea.vmem %s7, %s595
        // Predicated region
        $region37: #{tpu_custom_call.1} parent=35 // pred_check
          %p597 = pneg %p132
        $region38: #{tpu_custom_call.1} parent=35 // pred_check_branch
          %599 = sbr.rel (%p597) target = $region40
        $region39: #{tpu_custom_call.1} parent=35 // pred_region
          %s600 = smul.u32 2, %s25
          %s602 = ssub.s32 128, 128
          %603 = vsyncadd %s581, %s602
          %s604 = smul.addr %s600, 64
          %s605 = scalar_lea.hbm %s4, %s604
          %s607 = sshll.u32 %s584, 4
          %s608 = int_to_ptr.vmem [resolvable:$true] %s607
          %610 = dma.vmem_to_hbm [thread:$0]  %s608, 128, %s605, %s581
        $region40: #{tpu_custom_call.1} parent=35 // pred_fallthru
          _
        // Predicated region
        $region41: #{tpu_custom_call.1} parent=35 // pred_check
          %p611 = pneg %p158
        $region42: #{tpu_custom_call.1} parent=35 // pred_check_branch
          %613 = sbr.rel (%p611) target = $region44
        $region43: #{tpu_custom_call.1} parent=35 // pred_region
          %s614 = smul.u32 2, %s25
          %s616 = ssub.s32 32, 32
          %617 = vsyncadd %s586, %s616
          %s618 = smul.addr %s614, 16
          %s619 = scalar_lea.hbm %s5, %s618
          %s621 = sshll.u32 %s589, 4
          %s622 = int_to_ptr.vmem [resolvable:$true] %s621
          %624 = dma.vmem_to_hbm [thread:$0]  %s622, 32, %s619, %s586
        $region44: #{tpu_custom_call.1} parent=35 // pred_fallthru
          _
        // Predicated region
        $region45: #{tpu_custom_call.1} parent=35 // pred_check
          %p625 = pneg %p184
        $region46: #{tpu_custom_call.1} parent=35 // pred_check_branch
          %627 = sbr.rel (%p625) target = $region48
        $region47: #{tpu_custom_call.1} parent=35 // pred_region
          _
        $region48: #{tpu_custom_call.1} parent=35 // pred_fallthru
          _
        // Predicated region
        $region49: #{tpu_custom_call.1} parent=35 // pred_check
          %p628 = pneg %p210
        $region50: #{tpu_custom_call.1} parent=35 // pred_check_branch
          %630 = sbr.rel (%p628) target = $region52
        $region51: #{tpu_custom_call.1} parent=35 // pred_region
          _
        $region52: #{tpu_custom_call.1} parent=35 // pred_fallthru
          _
      $region36: #{tpu_custom_call.1} parent=5 // pred_fallthru
        _
      %p631 = scmp.le.s32.totalorder 2, %s20
      // Predicated region
      $region53: #{tpu_custom_call.1} parent=5 // pred_check
        %p632 = pneg %p631
      $region54: #{tpu_custom_call.1} parent=5 // pred_check_branch
        %634 = sbr.rel (%p632) target = $region56
      $region55: #{tpu_custom_call.1} parent=5 // pred_region
        %s635 = ssub.s32 %s20, 2
        // Predicated region
        $region57: #{tpu_custom_call.1} parent=55 // pred_check
          %p636 = pneg %p138
        $region58: #{tpu_custom_call.1} parent=55 // pred_check_branch
          %638 = sbr.rel (%p636) target = $region60
        $region59: #{tpu_custom_call.1} parent=55 // pred_region
          %s639 = sand.u32 %s123, 1
          %s640 = scalar_lea.sflag [#allocation3], %s639
          %s641 = sand.u32 %s123, 1
          %s642 = smul.addr %s641, 8
          %s643 = scalar_lea.vmem [#allocation2], %s642
          %644 = dma.done %s640, 128
        $region60: #{tpu_custom_call.1} parent=55 // pred_fallthru
          _
        // Predicated region
        $region61: #{tpu_custom_call.1} parent=55 // pred_check
          %p645 = pneg %p164
        $region62: #{tpu_custom_call.1} parent=55 // pred_check_branch
          %647 = sbr.rel (%p645) target = $region64
        $region63: #{tpu_custom_call.1} parent=55 // pred_region
          %s648 = sand.u32 %s149, 1
          %s649 = scalar_lea.sflag [#allocation5], %s648
          %s650 = sand.u32 %s149, 1
          %s651 = smul.addr %s650, 2
          %s652 = scalar_lea.vmem [#allocation4], %s651
          %653 = dma.done %s649, 32
        $region64: #{tpu_custom_call.1} parent=55 // pred_fallthru
          _
        // Predicated region
        $region65: #{tpu_custom_call.1} parent=55 // pred_check
          %p654 = pneg %p190
        $region66: #{tpu_custom_call.1} parent=55 // pred_check_branch
          %656 = sbr.rel (%p654) target = $region68
        $region67: #{tpu_custom_call.1} parent=55 // pred_region
          %p657 = scmp.lt.s32.totalorder %s26, 1
          %s658 = scalar_select %p657, %s26, 1
          %s659 = scalar_lea.vmem %s6, %s658
        $region68: #{tpu_custom_call.1} parent=55 // pred_fallthru
          _
        // Predicated region
        $region69: #{tpu_custom_call.1} parent=55 // pred_check
          %p660 = pneg %p216
        $region70: #{tpu_custom_call.1} parent=55 // pred_check_branch
          %662 = sbr.rel (%p660) target = $region72
        $region71: #{tpu_custom_call.1} parent=55 // pred_region
          %p663 = scmp.lt.s32.totalorder %s26, 1
          %s664 = scalar_select %p663, %s26, 1
          %s665 = smul.addr %s664, 8
          %s666 = scalar_lea.vmem %s7, %s665
        $region72: #{tpu_custom_call.1} parent=55 // pred_fallthru
          _
      $region56: #{tpu_custom_call.1} parent=5 // pred_fallthru
        _
    $region6: #{tpu_custom_call.1} parent=1 // loop_footer
      %s24 = sadd.s32 1, %s20
    $region7: #{tpu_custom_call.1} parent=1 // loop_footer_branch
      %19 = sbr.rel target = $region3
    $region8: #{tpu_custom_call.1} parent=1 // loop_exit
      _
    %667 = vsyncpa [#allocation3], 1
    %s668 = scalar_lea.sflag [#allocation3], 1
    %669 = vsyncpa %s668, 1
    %670 = vsyncpa [#allocation5], 1
    %s671 = scalar_lea.sflag [#allocation5], 1
    %672 = vsyncpa %s671, 1

</llo_original>
